<compile_context>
chip_gen: v5e
topology: v5e:2x2
jax: 0.10.0
libtpu: 0.0.40
codegen_flags: <defaults>
</compile_context>

<pallas_src>
from functools import partial

import numpy as np
import jax
import jax.numpy as jnp
from jax.experimental import pallas as pl
from jax.experimental.pallas import tpu as pltpu

_LANE = 128
_NEG_PAD = -1e30   # bias for padded expert-output lanes: softmax weight -> exactly 0


def _round_up(n, m):
    return ((n + m - 1) // m) * m


def _pick_batch_tile(B):
    """Batch tile for the 'parallel' grid axis.

    Prefer >= 2 grid steps (lets v7x shard the axis across its 2 TensorCores) with a
    sublane-aligned tile (multiple of 8, <= 128 rows).
    """
    if B >= 16 and B % 8 == 0:
        for tb in (128, 64, 32, 16, 8):
            if B % tb == 0 and B // tb >= 2:
                return tb
    # TODO(synk): the single full-batch fallback can exceed VMEM for very large B*Din;
    # pad the batch to a multiple of 8 instead of falling back to tb=B there.
    return B


# ----------------------------------------------------------------------------
# One-time parameter fusion / packing (done at init, NOT per forward call)
# ----------------------------------------------------------------------------
def prepare_moe_params(params):
    w1, b1, w2, b2 = params["w1"], params["b1"], params["w2"], params["b2"]
    E, Din, H = w1.shape
    Dout = w2.shape[-1]
    DP = _round_up(Dout, _LANE)          # lane-dense expert-output slab width

    # gating: one fused (Din, 2E) matmul operand, bf16 for the MXU
    w_gn = jnp.concatenate([params["w_gate"], params["w_noise"]], axis=1).astype(jnp.bfloat16)
    # layer 1: stacked (Din, E*H) so the MXU sees a lane-dense N in a single dot
    w1s = jnp.transpose(w1, (1, 0, 2)).reshape(Din, E * H).astype(jnp.bfloat16)
    b1s = b1.reshape(1, E * H).astype(jnp.float32)
    # layer 2: keep stacked (E, H, DP) — NO block-diagonal expansion. Pad the output dim
    # to 128 lanes with zero weights and a -1e30 bias so the per-expert softmax assigns
    # exactly 0 probability to the padded lanes (the wrapper slices them away).
    w2p = jnp.pad(w2, ((0, 0), (0, 0), (0, DP - Dout))).astype(jnp.bfloat16)
    b2p = jnp.pad(b2.astype(jnp.float32), ((0, 0), (0, DP - Dout)),
                  constant_values=_NEG_PAD)
    return dict(w_gn=w_gn, w1s=w1s, b1s=b1s, w2p=w2p, b2p=b2p)


# ----------------------------------------------------------------------------
# Kernel 1: noisy gating — fused (Din, 2E) matmul, packed lane-dense output
# ----------------------------------------------------------------------------
def _gating_kernel(E, GP, x_ref, wgn_ref, noise_ref, train_ref, out_ref):
    tb = x_ref.shape[0]
    xb = x_ref[...].astype(jnp.bfloat16)                    # MXU operand in bf16
    both = jnp.dot(xb, wgn_ref[...], preferred_element_type=jnp.float32)   # (tb, 2E) f32
    clean = both[:, :E]
    raw_noise = both[:, E:2 * E]
    # epilogue stays f32 (no bf16 VPU/EUP on v5e)
    std = (jax.nn.softplus(raw_noise) + jnp.float32(1e-10)) * train_ref[0]
    noisy = clean + noise_ref[...] * std
    # pack clean|noisy|std (+ zero pad) into one 128-lane slab: 1 unmasked store,
    # 1 output DMA instead of 3 narrow masked ones.
    pieces = [clean, noisy, std]
    if GP > 3 * E:
        pieces.append(jnp.zeros((tb, GP - 3 * E), jnp.float32))
    out_ref[...] = jnp.concatenate(pieces, axis=-1)


def noisy_gating_logits(x, w_gn, noise, train):
    B, Din = x.shape
    E = w_gn.shape[1] // 2
    GP = _round_up(3 * E, _LANE)
    tb = _pick_batch_tile(B)
    train_arr = jnp.full((1,), 1.0 if train else 0.0, dtype=jnp.float32)

    cost = pl.CostEstimate(
        flops=2 * B * Din * 2 * E,
        transcendentals=2 * B * E,
        bytes_accessed=4 * B * Din + 2 * Din * 2 * E + 4 * B * E + 4 * B * GP)

    packed = pl.pallas_call(
        partial(_gating_kernel, E, GP),
        out_shape=jax.ShapeDtypeStruct((B, GP), jnp.float32),
        grid_spec=pltpu.PrefetchScalarGridSpec(
            num_scalar_prefetch=0,
            grid=(B // tb,),
            in_specs=[
                pl.BlockSpec((tb, Din), lambda i: (i, 0)),
                pl.BlockSpec((Din, 2 * E), lambda i: (0, 0)),
                pl.BlockSpec((tb, E), lambda i: (i, 0)),
                pl.BlockSpec(memory_space=pltpu.MemorySpace.SMEM),   # train scalar
            ],
            out_specs=pl.BlockSpec((tb, GP), lambda i: (i, 0)),
        ),
        compiler_params=pltpu.CompilerParams(
            dimension_semantics=("parallel",),
            vmem_limit_bytes=32 * 1024 * 1024),
        cost_estimate=cost,
    )(x, w_gn, noise, train_arr)
    return packed[:, :E], packed[:, E:2 * E], packed[:, 2 * E:3 * E]


# ----------------------------------------------------------------------------
# Kernel 2: all experts (stacked W1, per-expert W2 dots) + gate-weighted exp combine
# ----------------------------------------------------------------------------
def _experts_kernel(E, H, DP, x_ref, g_ref, w1_ref, b1_ref, w2_ref, b2_ref, out_ref):
    tb = x_ref.shape[0]
    xb = x_ref[...].astype(jnp.bfloat16)
    g = g_ref[...]                                           # (tb, E) f32 gates

    # layer 1: all experts at once, lane-dense N = E*H, f32 accumulation
    h = jnp.dot(xb, w1_ref[...], preferred_element_type=jnp.float32) + b1_ref[...]
    h = jnp.maximum(h, 0.0)
    hb = h.astype(jnp.bfloat16)

    b2all = b2_ref[...]                                      # (E, DP) f32, one vreg-ish

    # layer 2 + per-expert softmax + gate-weighted exp combine.  E unrolled
    # (tb,H)@(H,DP) dots against the stacked weight — no block-diagonal, no zero FLOPs.
    # Padded lanes (bias -1e30) get softmax weight 0, then exp(0)=1 and sum(gates)=1,
    # so they end up as log(1)=0 and are sliced away by the wrapper.
    # TODO(synk): switch this static unroll to lax.fori_loop(..., unroll=True) if vreg
    # spills appear at larger E/Dout; for large E, move to a sparse scalar-prefetch
    # (grouped-matmul) dispatch so only the k selected experts per token hit the MXU.
    acc = jnp.zeros((tb, DP), dtype=jnp.float32)
    for e in range(E):
        he = hb[:, e * H:(e + 1) * H]                        # (tb, H) bf16
        oe = jnp.dot(he, w2_ref[e], preferred_element_type=jnp.float32) + b2all[e:e + 1, :]
        oe = oe - jnp.max(oe, axis=-1, keepdims=True)
        eo = jnp.exp(oe)
        sm = eo / jnp.sum(eo, axis=-1, keepdims=True)        # exact softmax (f32)
        acc = acc + g[:, e:e + 1] * jnp.exp(sm)
    acc = jnp.where(acc == 0.0, jnp.float32(np.finfo(np.float64).eps), acc)
    out_ref[...] = jnp.log(acc)


def moe_experts_combine(x, gates, w1s, b1s, w2p, b2p, dout):
    B, Din = x.shape
    E, H, DP = w2p.shape
    tb = _pick_batch_tile(B)

    cost = pl.CostEstimate(
        flops=2 * B * Din * E * H + 2 * B * E * H * DP,
        transcendentals=2 * B * E * DP + B * DP,
        bytes_accessed=(4 * B * Din + 4 * B * E + 2 * Din * E * H + 4 * E * H
                        + 2 * E * H * DP + 4 * E * DP + 4 * B * DP))

    out = pl.pallas_call(
        partial(_experts_kernel, E, H, DP),
        out_shape=jax.ShapeDtypeStruct((B, DP), jnp.float32),
        grid_spec=pltpu.PrefetchScalarGridSpec(
            num_scalar_prefetch=0,
            grid=(B // tb,),
            in_specs=[
                pl.BlockSpec((tb, Din), lambda i: (i, 0)),
                pl.BlockSpec((tb, E), lambda i: (i, 0)),
                pl.BlockSpec((Din, E * H), lambda i: (0, 0)),
                pl.BlockSpec((1, E * H), lambda i: (0, 0)),
                pl.BlockSpec((E, H, DP), lambda i: (0, 0, 0)),
                pl.BlockSpec((E, DP), lambda i: (0, 0)),
            ],
            out_specs=pl.BlockSpec((tb, DP), lambda i: (i, 0)),
        ),
        compiler_params=pltpu.CompilerParams(
            dimension_semantics=("parallel",),
            vmem_limit_bytes=32 * 1024 * 1024),
        cost_estimate=cost,
    )(x, gates, w1s, b1s, w2p, b2p)
    # TODO(synk): for weights too large to stay resident (esp. v7x's 64 MiB VMEM), add a
    # K/expert grid axis marked "arbitrary" with a VMEM accumulator and
    # pipeline_mode=pl.Buffered(1) on the grid-invariant weight specs.
    return out[:, :dout]


# ----------------------------------------------------------------------------
# Plain-JAX glue (top-k / scatter / load statistics / cv^2 loss)
# ----------------------------------------------------------------------------
def cv_squared(v):
    eps = 1e-10
    if v.shape[0] == 1:
        return jnp.float32(0.0)
    return jnp.var(v, ddof=1) / (jnp.mean(v) ** 2 + eps)   # torch .var() is unbiased


@partial(jax.jit, static_argnames=("k", "dout", "noisy_gating", "train", "loss_coef"))
def moe_forward(x, prep, noise_key, *, k, dout, noisy_gating=True, train=True,
                loss_coef=0.01):
    w_gn = prep["w_gn"]
    B = x.shape[0]
    E = w_gn.shape[1] // 2

    noise = jax.random.normal(noise_key, (B, E), dtype=jnp.float32)
    clean, noisy, std = noisy_gating_logits(x, w_gn, noise, train)
    logits = noisy if noisy_gating else clean

    # TODO(synk): top-k selection + sparse gate scatter (SparseDispatcher index
    # bookkeeping) stays in plain JAX — tiny O(B*E) data-dependent work.
    m = min(k + 1, E)
    top_logits, top_indices = jax.lax.top_k(logits, m)
    top_k_logits = top_logits[:, :k]
    top_k_indices = top_indices[:, :k]
    top_k_gates = jax.nn.softmax(top_k_logits, axis=1)
    gates = jnp.zeros_like(logits).at[
        jnp.arange(B)[:, None], top_k_indices].set(top_k_gates)

    # `and train` avoids the (clean - thr)/std division when std == 0 in eval mode.
    if noisy_gating and k < E and train:
        thr_in = top_logits[:, k:k + 1]
        thr_out = top_logits[:, k - 1:k]
        is_in = noisy > thr_in
        prob_in = jax.scipy.stats.norm.cdf((clean - thr_in) / std)
        prob_out = jax.scipy.stats.norm.cdf((clean - thr_out) / std)
        load = jnp.where(is_in, prob_in, prob_out).sum(0)
    else:
        load = (gates > 0).sum(0).astype(jnp.float32)

    importance = gates.sum(0)
    loss = (cv_squared(importance) + cv_squared(load)) * loss_coef

    y = moe_experts_combine(x, gates, prep["w1s"], prep["b1s"],
                            prep["w2p"], prep["b2p"], dout)
    return y, loss


# ----------------------------------------------------------------------------
if __name__ == "__main__":
    # B=16 gives a 2-step "parallel" batch grid (both v7x TensorCores usable).
    B, Din, H, Dout, E, K = 16, 32, 32, 32, 8, 4

    key = jax.random.PRNGKey(0)
    ks = jax.random.split(key, 8)

    x = jax.random.normal(ks[0], (B, Din), dtype=jnp.float32)

    # Module __init__ zero-inits w_gate/w_noise; use small random values here so the
    # gating matmul path is non-degenerate.
    lim1 = 1.0 / np.sqrt(Din)
    lim2 = 1.0 / np.sqrt(H)
    params = dict(
        w_gate=0.1 * jax.random.normal(ks[1], (Din, E), dtype=jnp.float32),
        w_noise=0.1 * jax.random.normal(ks[2], (Din, E), dtype=jnp.float32),
        w1=jax.random.uniform(ks[3], (E, Din, H), jnp.float32, -lim1, lim1),
        b1=jax.random.uniform(ks[4], (E, H), jnp.float32, -lim1, lim1),
        w2=jax.random.uniform(ks[5], (E, H, Dout), jnp.float32, -lim2, lim2),
        b2=jax.random.uniform(ks[6], (E, Dout), jnp.float32, -lim2, lim2),
    )
    prep = prepare_moe_params(params)     # one-time weight fusion / packing

    y, loss = moe_forward(x, prep, ks[7], k=K, dout=Dout,
                          noisy_gating=True, train=True, loss_coef=0.01)
    (y, loss) = jax.block_until_ready((y, loss))

    y_np = np.asarray(y)
    loss_np = float(loss)
    assert y_np.shape == (B, Dout)
    assert np.isfinite(y_np).all() and np.isfinite(loss_np)
    # combine output = log(sum_e gate_e * exp(softmax_e)) with sum_e gate_e == 1,
    # so every entry must lie in (0, 1).
    assert (y_np >= -1e-4).all() and (y_np <= 1.0 + 1e-4).all()

    print("KERNEL_OK")
</pallas_src>

<mosaic_0001>
module attributes {stable_mosaic.version = 11 : i64} {
  func.func @_gating_kernel(%arg0: i32, %arg1: memref<8x32xf32, #tpu.memory_space<vmem>>, %arg2: memref<32x16xbf16, #tpu.memory_space<vmem>>, %arg3: memref<8x8xf32, #tpu.memory_space<vmem>>, %arg4: memref<1xf32, #tpu.memory_space<smem>>, %arg5: memref<8x128xf32, #tpu.memory_space<vmem>>) attributes {dimension_semantics = [#tpu.dimension_semantics<parallel>], iteration_bounds = array<i64: 2>, scalar_prefetch = 0 : i64, scratch_operands = 0 : i64, tpu.core_type = #tpu.core_type<tc>, window_params = [{transform_indices = @transform_0, window_bounds = array<i64: 8, 32>}, {pipeline_mode = #tpu.pipeline_mode<synchronous>, transform_indices = @transform_1, window_bounds = array<i64: 32, 16>}, {transform_indices = @transform_2, window_bounds = array<i64: 8, 8>}, {transform_indices = @transform_3, window_bounds = array<i64: 1>}, {transform_indices = @transform_4, window_bounds = array<i64: 8, 128>}]} {
    %c0 = arith.constant 0 : index
    %c0_0 = arith.constant 0 : index
    %0 = vector.load %arg1[%c0, %c0_0] : memref<8x32xf32, #tpu.memory_space<vmem>>, vector<8x32xf32>
    %1 = arith.truncf %0 : vector<8x32xf32> to vector<8x32xbf16>
    %c0_1 = arith.constant 0 : index
    %c0_2 = arith.constant 0 : index
    %2 = vector.load %arg2[%c0_1, %c0_2] : memref<32x16xbf16, #tpu.memory_space<vmem>>, vector<32x16xbf16>
    %cst = arith.constant dense<0.000000e+00> : vector<8x16xf32>
    %3 = tpu.matmul %1, %2, %cst {dimension_numbers = #tpu.dot_dimension_numbers<[1], [0], [0], [1], [0, 0, 1, 1], [], []>} : vector<8x32xbf16>, vector<32x16xbf16>, vector<8x16xf32> -> vector<8x16xf32>
    %4 = vector.extract_strided_slice %3 {offsets = [0, 0], sizes = [8, 8], strides = [1, 1]} : vector<8x16xf32> to vector<8x8xf32>
    %5 = vector.extract_strided_slice %3 {offsets = [0, 8], sizes = [8, 8], strides = [1, 1]} : vector<8x16xf32> to vector<8x8xf32>
    %cst_3 = arith.constant 0.000000e+00 : f32
    %6 = vector.broadcast %cst_3 : f32 to vector<8x8xf32>
    %7 = arith.maximumf %5, %6 : vector<8x8xf32>
    %8 = vector.broadcast %cst_3 : f32 to vector<8x8xf32>
    %9 = arith.subf %5, %8 : vector<8x8xf32>
    %10 = arith.cmpf one, %9, %9 : vector<8x8xf32>
    %11 = vector.broadcast %cst_3 : f32 to vector<8x8xf32>
    %12 = arith.addf %5, %11 : vector<8x8xf32>
    %13 = math.absf %9 : vector<8x8xf32>
    %cst_4 = arith.constant 0.000000e+00 : f32
    %14 = vector.broadcast %cst_4 : f32 to vector<8x8xf32>
    %15 = arith.subf %14, %13 : vector<8x8xf32>
    %16 = math.exp %15 : vector<8x8xf32>
    %17 = math.log1p %16 : vector<8x8xf32>
    %18 = arith.addf %7, %17 : vector<8x8xf32>
    %19 = arith.select %10, %12, %18 : vector<8x8xi1>, vector<8x8xf32>
    %cst_5 = arith.constant 1.000000e-10 : f32
    %20 = vector.broadcast %cst_5 : f32 to vector<8x8xf32>
    %21 = arith.addf %19, %20 : vector<8x8xf32>
    %c0_6 = arith.constant 0 : index
    %22 = memref.load %arg4[%c0_6] : memref<1xf32, #tpu.memory_space<smem>>
    %23 = vector.broadcast %22 : f32 to vector<8x8xf32>
    %24 = arith.mulf %21, %23 : vector<8x8xf32>
    %c0_7 = arith.constant 0 : index
    %c0_8 = arith.constant 0 : index
    %25 = vector.load %arg3[%c0_7, %c0_8] : memref<8x8xf32, #tpu.memory_space<vmem>>, vector<8x8xf32>
    %26 = arith.mulf %25, %24 : vector<8x8xf32>
    %27 = arith.addf %4, %26 : vector<8x8xf32>
    %cst_9 = arith.constant 0.000000e+00 : f32
    %28 = vector.broadcast %cst_9 : f32 to vector<8x104xf32>
    %29 = tpu.concatenate %4, %27, %24, %28 in 1 : vector<8x8xf32>, vector<8x8xf32>, vector<8x8xf32>, vector<8x104xf32> -> vector<8x128xf32>
    %c0_10 = arith.constant 0 : index
    %c0_11 = arith.constant 0 : index
    %30 = vector.load %arg5[%c0_10, %c0_11] : memref<8x128xf32, #tpu.memory_space<vmem>>, vector<8x128xf32>
    tpu.vector_store %arg5[%c0_10, %c0_11], %29 {strides = array<i32>} : memref<8x128xf32, #tpu.memory_space<vmem>>, vector<8x128xf32>,
    return
  }
  func.func @transform_0(%arg0: i32) -> (i32, i32) {
    %c0_i32 = arith.constant 0 : i32
    %c0_i32_0 = arith.constant 0 : i32
    return %arg0, %c0_i32 : i32, i32
  }
  func.func @transform_1(%arg0: i32) -> (i32, i32) {
    %c0_i32 = arith.constant 0 : i32
    %c0_i32_0 = arith.constant 0 : i32
    %c0_i32_1 = arith.constant 0 : i32
    return %c0_i32, %c0_i32_0 : i32, i32
  }
  func.func @transform_2(%arg0: i32) -> (i32, i32) {
    %c0_i32 = arith.constant 0 : i32
    %c0_i32_0 = arith.constant 0 : i32
    return %arg0, %c0_i32 : i32, i32
  }
  func.func @transform_3(%arg0: i32) -> i32 {
    %c0_i32 = arith.constant 0 : i32
    %c0_i32_0 = arith.constant 0 : i32
    return %c0_i32 : i32
  }
  func.func @transform_4(%arg0: i32) -> (i32, i32) {
    %c0_i32 = arith.constant 0 : i32
    %c0_i32_0 = arith.constant 0 : i32
    return %arg0, %c0_i32 : i32, i32
  }
}

module attributes {stable_mosaic.version = 11 : i64} {
  func.func @_experts_kernel(%arg0: i32, %arg1: memref<8x32xf32, #tpu.memory_space<vmem>>, %arg2: memref<8x8xf32, #tpu.memory_space<vmem>>, %arg3: memref<32x256xbf16, #tpu.memory_space<vmem>>, %arg4: memref<1x256xf32, #tpu.memory_space<vmem>>, %arg5: memref<8x32x128xbf16, #tpu.memory_space<vmem>>, %arg6: memref<8x128xf32, #tpu.memory_space<vmem>>, %arg7: memref<8x128xf32, #tpu.memory_space<vmem>>) attributes {dimension_semantics = [#tpu.dimension_semantics<parallel>], iteration_bounds = array<i64: 2>, scalar_prefetch = 0 : i64, scratch_operands = 0 : i64, tpu.core_type = #tpu.core_type<tc>, window_params = [{transform_indices = @transform_0, window_bounds = array<i64: 8, 32>}, {transform_indices = @transform_1, window_bounds = array<i64: 8, 8>}, {pipeline_mode = #tpu.pipeline_mode<synchronous>, transform_indices = @transform_2, window_bounds = array<i64: 32, 256>}, {pipeline_mode = #tpu.pipeline_mode<synchronous>, transform_indices = @transform_3, window_bounds = array<i64: 1, 256>}, {pipeline_mode = #tpu.pipeline_mode<synchronous>, transform_indices = @transform_4, window_bounds = array<i64: 8, 32, 128>}, {pipeline_mode = #tpu.pipeline_mode<synchronous>, transform_indices = @transform_5, window_bounds = array<i64: 8, 128>}, {transform_indices = @transform_6, window_bounds = array<i64: 8, 128>}]} {
    %c0 = arith.constant 0 : index
    %c0_0 = arith.constant 0 : index
    %0 = vector.load %arg1[%c0, %c0_0] : memref<8x32xf32, #tpu.memory_space<vmem>>, vector<8x32xf32>
    %1 = arith.truncf %0 : vector<8x32xf32> to vector<8x32xbf16>
    %c0_1 = arith.constant 0 : index
    %c0_2 = arith.constant 0 : index
    %2 = vector.load %arg2[%c0_1, %c0_2] : memref<8x8xf32, #tpu.memory_space<vmem>>, vector<8x8xf32>
    %c0_3 = arith.constant 0 : index
    %c0_4 = arith.constant 0 : index
    %3 = vector.load %arg3[%c0_3, %c0_4] : memref<32x256xbf16, #tpu.memory_space<vmem>>, vector<32x256xbf16>
    %cst = arith.constant dense<0.000000e+00> : vector<8x256xf32>
    %4 = tpu.matmul %1, %3, %cst {dimension_numbers = #tpu.dot_dimension_numbers<[1], [0], [0], [1], [0, 0, 1, 1], [], []>} : vector<8x32xbf16>, vector<32x256xbf16>, vector<8x256xf32> -> vector<8x256xf32>
    %c0_5 = arith.constant 0 : index
    %c0_6 = arith.constant 0 : index
    %5 = vector.load %arg4[%c0_5, %c0_6] : memref<1x256xf32, #tpu.memory_space<vmem>>, vector<1x256xf32>
    %6 = vector.broadcast %5 : vector<1x256xf32> to vector<8x256xf32>
    %7 = arith.addf %4, %6 : vector<8x256xf32>
    %cst_7 = arith.constant 0.000000e+00 : f32
    %8 = vector.broadcast %cst_7 : f32 to vector<8x256xf32>
    %9 = arith.maximumf %7, %8 : vector<8x256xf32>
    %10 = arith.truncf %9 : vector<8x256xf32> to vector<8x256xbf16>
    %c0_8 = arith.constant 0 : index
    %c0_9 = arith.constant 0 : index
    %11 = vector.load %arg6[%c0_8, %c0_9] : memref<8x128xf32, #tpu.memory_space<vmem>>, vector<8x128xf32>
    %cst_10 = arith.constant 0.000000e+00 : f32
    %12 = vector.broadcast %cst_10 : f32 to vector<8x128xf32>
    %13 = vector.extract_strided_slice %10 {offsets = [0, 0], sizes = [8, 32], strides = [1, 1]} : vector<8x256xbf16> to vector<8x32xbf16>
    %c0_11 = arith.constant 0 : index
    %c0_12 = arith.constant 0 : index
    %c0_13 = arith.constant 0 : index
    %14 = vector.load %arg5[%c0_11, %c0_12, %c0_13] : memref<8x32x128xbf16, #tpu.memory_space<vmem>>, vector<1x32x128xbf16>
    %15 = vector.shape_cast %14 : vector<1x32x128xbf16> to vector<32x128xbf16>
    %cst_14 = arith.constant dense<0.000000e+00> : vector<8x128xf32>
    %16 = tpu.matmul %13, %15, %cst_14 {dimension_numbers = #tpu.dot_dimension_numbers<[1], [0], [0], [1], [0, 0, 1, 1], [], []>} : vector<8x32xbf16>, vector<32x128xbf16>, vector<8x128xf32> -> vector<8x128xf32>
    %17 = vector.extract_strided_slice %11 {offsets = [0, 0], sizes = [1, 128], strides = [1, 1]} : vector<8x128xf32> to vector<1x128xf32>
    %18 = vector.broadcast %17 : vector<1x128xf32> to vector<8x128xf32>
    %19 = arith.addf %16, %18 : vector<8x128xf32>
    %cst_15 = arith.constant dense<0xFF800000> : vector<8xf32>
    %20 = vector.multi_reduction <maximumf>, %19, %cst_15 [1] : vector<8x128xf32> to vector<8xf32>
    %21 = vector.shape_cast %20 : vector<8xf32> to vector<8x1xf32>
    %22 = vector.broadcast %21 : vector<8x1xf32> to vector<8x128xf32>
    %23 = arith.subf %19, %22 : vector<8x128xf32>
    %24 = math.exp %23 : vector<8x128xf32>
    %cst_16 = arith.constant dense<0.000000e+00> : vector<8xf32>
    %25 = vector.multi_reduction <add>, %24, %cst_16 [1] : vector<8x128xf32> to vector<8xf32>
    %26 = vector.shape_cast %25 : vector<8xf32> to vector<8x1xf32>
    %27 = vector.broadcast %26 : vector<8x1xf32> to vector<8x128xf32>
    %28 = arith.divf %24, %27 : vector<8x128xf32>
    %29 = vector.extract_strided_slice %2 {offsets = [0, 0], sizes = [8, 1], strides = [1, 1]} : vector<8x8xf32> to vector<8x1xf32>
    %30 = math.exp %28 : vector<8x128xf32>
    %31 = vector.broadcast %29 : vector<8x1xf32> to vector<8x128xf32>
    %32 = arith.mulf %31, %30 : vector<8x128xf32>
    %33 = arith.addf %12, %32 : vector<8x128xf32>
    %34 = vector.extract_strided_slice %10 {offsets = [0, 32], sizes = [8, 32], strides = [1, 1]} : vector<8x256xbf16> to vector<8x32xbf16>
    %c1 = arith.constant 1 : index
    %c0_17 = arith.constant 0 : index
    %c0_18 = arith.constant 0 : index
    %35 = vector.load %arg5[%c1, %c0_17, %c0_18] : memref<8x32x128xbf16, #tpu.memory_space<vmem>>, vector<1x32x128xbf16>
    %36 = vector.shape_cast %35 : vector<1x32x128xbf16> to vector<32x128xbf16>
    %cst_19 = arith.constant dense<0.000000e+00> : vector<8x128xf32>
    %37 = tpu.matmul %34, %36, %cst_19 {dimension_numbers = #tpu.dot_dimension_numbers<[1], [0], [0], [1], [0, 0, 1, 1], [], []>} : vector<8x32xbf16>, vector<32x128xbf16>, vector<8x128xf32> -> vector<8x128xf32>
    %38 = vector.extract_strided_slice %11 {offsets = [1, 0], sizes = [1, 128], strides = [1, 1]} : vector<8x128xf32> to vector<1x128xf32>
    %39 = vector.broadcast %38 : vector<1x128xf32> to vector<8x128xf32>
    %40 = arith.addf %37, %39 : vector<8x128xf32>
    %cst_20 = arith.constant dense<0xFF800000> : vector<8xf32>
    %41 = vector.multi_reduction <maximumf>, %40, %cst_20 [1] : vector<8x128xf32> to vector<8xf32>
    %42 = vector.shape_cast %41 : vector<8xf32> to vector<8x1xf32>
    %43 = vector.broadcast %42 : vector<8x1xf32> to vector<8x128xf32>
    %44 = arith.subf %40, %43 : vector<8x128xf32>
    %45 = math.exp %44 : vector<8x128xf32>
    %cst_21 = arith.constant dense<0.000000e+00> : vector<8xf32>
    %46 = vector.multi_reduction <add>, %45, %cst_21 [1] : vector<8x128xf32> to vector<8xf32>
    %47 = vector.shape_cast %46 : vector<8xf32> to vector<8x1xf32>
    %48 = vector.broadcast %47 : vector<8x1xf32> to vector<8x128xf32>
    %49 = arith.divf %45, %48 : vector<8x128xf32>
    %50 = vector.extract_strided_slice %2 {offsets = [0, 1], sizes = [8, 1], strides = [1, 1]} : vector<8x8xf32> to vector<8x1xf32>
    %51 = math.exp %49 : vector<8x128xf32>
    %52 = vector.broadcast %50 : vector<8x1xf32> to vector<8x128xf32>
    %53 = arith.mulf %52, %51 : vector<8x128xf32>
    %54 = arith.addf %33, %53 : vector<8x128xf32>
    %55 = vector.extract_strided_slice %10 {offsets = [0, 64], sizes = [8, 32], strides = [1, 1]} : vector<8x256xbf16> to vector<8x32xbf16>
    %c2 = arith.constant 2 : index
    %c0_22 = arith.constant 0 : index
    %c0_23 = arith.constant 0 : index
    %56 = vector.load %arg5[%c2, %c0_22, %c0_23] : memref<8x32x128xbf16, #tpu.memory_space<vmem>>, vector<1x32x128xbf16>
    %57 = vector.shape_cast %56 : vector<1x32x128xbf16> to vector<32x128xbf16>
    %cst_24 = arith.constant dense<0.000000e+00> : vector<8x128xf32>
    %58 = tpu.matmul %55, %57, %cst_24 {dimension_numbers = #tpu.dot_dimension_numbers<[1], [0], [0], [1], [0, 0, 1, 1], [], []>} : vector<8x32xbf16>, vector<32x128xbf16>, vector<8x128xf32> -> vector<8x128xf32>
    %59 = vector.extract_strided_slice %11 {offsets = [2, 0], sizes = [1, 128], strides = [1, 1]} : vector<8x128xf32> to vector<1x128xf32>
    %60 = vector.broadcast %59 : vector<1x128xf32> to vector<8x128xf32>
    %61 = arith.addf %58, %60 : vector<8x128xf32>
    %cst_25 = arith.constant dense<0xFF800000> : vector<8xf32>
    %62 = vector.multi_reduction <maximumf>, %61, %cst_25 [1] : vector<8x128xf32> to vector<8xf32>
    %63 = vector.shape_cast %62 : vector<8xf32> to vector<8x1xf32>
    %64 = vector.broadcast %63 : vector<8x1xf32> to vector<8x128xf32>
    %65 = arith.subf %61, %64 : vector<8x128xf32>
    %66 = math.exp %65 : vector<8x128xf32>
    %cst_26 = arith.constant dense<0.000000e+00> : vector<8xf32>
    %67 = vector.multi_reduction <add>, %66, %cst_26 [1] : vector<8x128xf32> to vector<8xf32>
    %68 = vector.shape_cast %67 : vector<8xf32> to vector<8x1xf32>
    %69 = vector.broadcast %68 : vector<8x1xf32> to vector<8x128xf32>
    %70 = arith.divf %66, %69 : vector<8x128xf32>
    %71 = vector.extract_strided_slice %2 {offsets = [0, 2], sizes = [8, 1], strides = [1, 1]} : vector<8x8xf32> to vector<8x1xf32>
    %72 = math.exp %70 : vector<8x128xf32>
    %73 = vector.broadcast %71 : vector<8x1xf32> to vector<8x128xf32>
    %74 = arith.mulf %73, %72 : vector<8x128xf32>
    %75 = arith.addf %54, %74 : vector<8x128xf32>
    %76 = vector.extract_strided_slice %10 {offsets = [0, 96], sizes = [8, 32], strides = [1, 1]} : vector<8x256xbf16> to vector<8x32xbf16>
    %c3 = arith.constant 3 : index
    %c0_27 = arith.constant 0 : index
    %c0_28 = arith.constant 0 : index
    %77 = vector.load %arg5[%c3, %c0_27, %c0_28] : memref<8x32x128xbf16, #tpu.memory_space<vmem>>, vector<1x32x128xbf16>
    %78 = vector.shape_cast %77 : vector<1x32x128xbf16> to vector<32x128xbf16>
    %cst_29 = arith.constant dense<0.000000e+00> : vector<8x128xf32>
    %79 = tpu.matmul %76, %78, %cst_29 {dimension_numbers = #tpu.dot_dimension_numbers<[1], [0], [0], [1], [0, 0, 1, 1], [], []>} : vector<8x32xbf16>, vector<32x128xbf16>, vector<8x128xf32> -> vector<8x128xf32>
    %80 = vector.extract_strided_slice %11 {offsets = [3, 0], sizes = [1, 128], strides = [1, 1]} : vector<8x128xf32> to vector<1x128xf32>
    %81 = vector.broadcast %80 : vector<1x128xf32> to vector<8x128xf32>
    %82 = arith.addf %79, %81 : vector<8x128xf32>
    %cst_30 = arith.constant dense<0xFF800000> : vector<8xf32>
    %83 = vector.multi_reduction <maximumf>, %82, %cst_30 [1] : vector<8x128xf32> to vector<8xf32>
    %84 = vector.shape_cast %83 : vector<8xf32> to vector<8x1xf32>
    %85 = vector.broadcast %84 : vector<8x1xf32> to vector<8x128xf32>
    %86 = arith.subf %82, %85 : vector<8x128xf32>
    %87 = math.exp %86 : vector<8x128xf32>
    %cst_31 = arith.constant dense<0.000000e+00> : vector<8xf32>
    %88 = vector.multi_reduction <add>, %87, %cst_31 [1] : vector<8x128xf32> to vector<8xf32>
    %89 = vector.shape_cast %88 : vector<8xf32> to vector<8x1xf32>
    %90 = vector.broadcast %89 : vector<8x1xf32> to vector<8x128xf32>
    %91 = arith.divf %87, %90 : vector<8x128xf32>
    %92 = vector.extract_strided_slice %2 {offsets = [0, 3], sizes = [8, 1], strides = [1, 1]} : vector<8x8xf32> to vector<8x1xf32>
    %93 = math.exp %91 : vector<8x128xf32>
    %94 = vector.broadcast %92 : vector<8x1xf32> to vector<8x128xf32>
    %95 = arith.mulf %94, %93 : vector<8x128xf32>
    %96 = arith.addf %75, %95 : vector<8x128xf32>
    %97 = vector.extract_strided_slice %10 {offsets = [0, 128], sizes = [8, 32], strides = [1, 1]} : vector<8x256xbf16> to vector<8x32xbf16>
    %c4 = arith.constant 4 : index
    %c0_32 = arith.constant 0 : index
    %c0_33 = arith.constant 0 : index
    %98 = vector.load %arg5[%c4, %c0_32, %c0_33] : memref<8x32x128xbf16, #tpu.memory_space<vmem>>, vector<1x32x128xbf16>
    %99 = vector.shape_cast %98 : vector<1x32x128xbf16> to vector<32x128xbf16>
    %cst_34 = arith.constant dense<0.000000e+00> : vector<8x128xf32>
    %100 = tpu.matmul %97, %99, %cst_34 {dimension_numbers = #tpu.dot_dimension_numbers<[1], [0], [0], [1], [0, 0, 1, 1], [], []>} : vector<8x32xbf16>, vector<32x128xbf16>, vector<8x128xf32> -> vector<8x128xf32>
    %101 = vector.extract_strided_slice %11 {offsets = [4, 0], sizes = [1, 128], strides = [1, 1]} : vector<8x128xf32> to vector<1x128xf32>
    %102 = vector.broadcast %101 : vector<1x128xf32> to vector<8x128xf32>
    %103 = arith.addf %100, %102 : vector<8x128xf32>
    %cst_35 = arith.constant dense<0xFF800000> : vector<8xf32>
    %104 = vector.multi_reduction <maximumf>, %103, %cst_35 [1] : vector<8x128xf32> to vector<8xf32>
    %105 = vector.shape_cast %104 : vector<8xf32> to vector<8x1xf32>
    %106 = vector.broadcast %105 : vector<8x1xf32> to vector<8x128xf32>
    %107 = arith.subf %103, %106 : vector<8x128xf32>
    %108 = math.exp %107 : vector<8x128xf32>
    %cst_36 = arith.constant dense<0.000000e+00> : vector<8xf32>
    %109 = vector.multi_reduction <add>, %108, %cst_36 [1] : vector<8x128xf32> to vector<8xf32>
    %110 = vector.shape_cast %109 : vector<8xf32> to vector<8x1xf32>
    %111 = vector.broadcast %110 : vector<8x1xf32> to vector<8x128xf32>
    %112 = arith.divf %108, %111 : vector<8x128xf32>
    %113 = vector.extract_strided_slice %2 {offsets = [0, 4], sizes = [8, 1], strides = [1, 1]} : vector<8x8xf32> to vector<8x1xf32>
    %114 = math.exp %112 : vector<8x128xf32>
    %115 = vector.broadcast %113 : vector<8x1xf32> to vector<8x128xf32>
    %116 = arith.mulf %115, %114 : vector<8x128xf32>
    %117 = arith.addf %96, %116 : vector<8x128xf32>
    %118 = vector.extract_strided_slice %10 {offsets = [0, 160], sizes = [8, 32], strides = [1, 1]} : vector<8x256xbf16> to vector<8x32xbf16>
    %c5 = arith.constant 5 : index
    %c0_37 = arith.constant 0 : index
    %c0_38 = arith.constant 0 : index
    %119 = vector.load %arg5[%c5, %c0_37, %c0_38] : memref<8x32x128xbf16, #tpu.memory_space<vmem>>, vector<1x32x128xbf16>
    %120 = vector.shape_cast %119 : vector<1x32x128xbf16> to vector<32x128xbf16>
    %cst_39 = arith.constant dense<0.000000e+00> : vector<8x128xf32>
    %121 = tpu.matmul %118, %120, %cst_39 {dimension_numbers = #tpu.dot_dimension_numbers<[1], [0], [0], [1], [0, 0, 1, 1], [], []>} : vector<8x32xbf16>, vector<32x128xbf16>, vector<8x128xf32> -> vector<8x128xf32>
    %122 = vector.extract_strided_slice %11 {offsets = [5, 0], sizes = [1, 128], strides = [1, 1]} : vector<8x128xf32> to vector<1x128xf32>
    %123 = vector.broadcast %122 : vector<1x128xf32> to vector<8x128xf32>
    %124 = arith.addf %121, %123 : vector<8x128xf32>
    %cst_40 = arith.constant dense<0xFF800000> : vector<8xf32>
    %125 = vector.multi_reduction <maximumf>, %124, %cst_40 [1] : vector<8x128xf32> to vector<8xf32>
    %126 = vector.shape_cast %125 : vector<8xf32> to vector<8x1xf32>
    %127 = vector.broadcast %126 : vector<8x1xf32> to vector<8x128xf32>
    %128 = arith.subf %124, %127 : vector<8x128xf32>
    %129 = math.exp %128 : vector<8x128xf32>
    %cst_41 = arith.constant dense<0.000000e+00> : vector<8xf32>
    %130 = vector.multi_reduction <add>, %129, %cst_41 [1] : vector<8x128xf32> to vector<8xf32>
    %131 = vector.shape_cast %130 : vector<8xf32> to vector<8x1xf32>
    %132 = vector.broadcast %131 : vector<8x1xf32> to vector<8x128xf32>
    %133 = arith.divf %129, %132 : vector<8x128xf32>
    %134 = vector.extract_strided_slice %2 {offsets = [0, 5], sizes = [8, 1], strides = [1, 1]} : vector<8x8xf32> to vector<8x1xf32>
    %135 = math.exp %133 : vector<8x128xf32>
    %136 = vector.broadcast %134 : vector<8x1xf32> to vector<8x128xf32>
    %137 = arith.mulf %136, %135 : vector<8x128xf32>
    %138 = arith.addf %117, %137 : vector<8x128xf32>
    %139 = vector.extract_strided_slice %10 {offsets = [0, 192], sizes = [8, 32], strides = [1, 1]} : vector<8x256xbf16> to vector<8x32xbf16>
    %c6 = arith.constant 6 : index
    %c0_42 = arith.constant 0 : index
    %c0_43 = arith.constant 0 : index
    %140 = vector.load %arg5[%c6, %c0_42, %c0_43] : memref<8x32x128xbf16, #tpu.memory_space<vmem>>, vector<1x32x128xbf16>
    %141 = vector.shape_cast %140 : vector<1x32x128xbf16> to vector<32x128xbf16>
    %cst_44 = arith.constant dense<0.000000e+00> : vector<8x128xf32>
    %142 = tpu.matmul %139, %141, %cst_44 {dimension_numbers = #tpu.dot_dimension_numbers<[1], [0], [0], [1], [0, 0, 1, 1], [], []>} : vector<8x32xbf16>, vector<32x128xbf16>, vector<8x128xf32> -> vector<8x128xf32>
    %143 = vector.extract_strided_slice %11 {offsets = [6, 0], sizes = [1, 128], strides = [1, 1]} : vector<8x128xf32> to vector<1x128xf32>
    %144 = vector.broadcast %143 : vector<1x128xf32> to vector<8x128xf32>
    %145 = arith.addf %142, %144 : vector<8x128xf32>
    %cst_45 = arith.constant dense<0xFF800000> : vector<8xf32>
    %146 = vector.multi_reduction <maximumf>, %145, %cst_45 [1] : vector<8x128xf32> to vector<8xf32>
    %147 = vector.shape_cast %146 : vector<8xf32> to vector<8x1xf32>
    %148 = vector.broadcast %147 : vector<8x1xf32> to vector<8x128xf32>
    %149 = arith.subf %145, %148 : vector<8x128xf32>
    %150 = math.exp %149 : vector<8x128xf32>
    %cst_46 = arith.constant dense<0.000000e+00> : vector<8xf32>
    %151 = vector.multi_reduction <add>, %150, %cst_46 [1] : vector<8x128xf32> to vector<8xf32>
    %152 = vector.shape_cast %151 : vector<8xf32> to vector<8x1xf32>
    %153 = vector.broadcast %152 : vector<8x1xf32> to vector<8x128xf32>
    %154 = arith.divf %150, %153 : vector<8x128xf32>
    %155 = vector.extract_strided_slice %2 {offsets = [0, 6], sizes = [8, 1], strides = [1, 1]} : vector<8x8xf32> to vector<8x1xf32>
    %156 = math.exp %154 : vector<8x128xf32>
    %157 = vector.broadcast %155 : vector<8x1xf32> to vector<8x128xf32>
    %158 = arith.mulf %157, %156 : vector<8x128xf32>
    %159 = arith.addf %138, %158 : vector<8x128xf32>
    %160 = vector.extract_strided_slice %10 {offsets = [0, 224], sizes = [8, 32], strides = [1, 1]} : vector<8x256xbf16> to vector<8x32xbf16>
    %c7 = arith.constant 7 : index
    %c0_47 = arith.constant 0 : index
    %c0_48 = arith.constant 0 : index
    %161 = vector.load %arg5[%c7, %c0_47, %c0_48] : memref<8x32x128xbf16, #tpu.memory_space<vmem>>, vector<1x32x128xbf16>
    %162 = vector.shape_cast %161 : vector<1x32x128xbf16> to vector<32x128xbf16>
    %cst_49 = arith.constant dense<0.000000e+00> : vector<8x128xf32>
    %163 = tpu.matmul %160, %162, %cst_49 {dimension_numbers = #tpu.dot_dimension_numbers<[1], [0], [0], [1], [0, 0, 1, 1], [], []>} : vector<8x32xbf16>, vector<32x128xbf16>, vector<8x128xf32> -> vector<8x128xf32>
    %164 = vector.extract_strided_slice %11 {offsets = [7, 0], sizes = [1, 128], strides = [1, 1]} : vector<8x128xf32> to vector<1x128xf32>
    %165 = vector.broadcast %164 : vector<1x128xf32> to vector<8x128xf32>
    %166 = arith.addf %163, %165 : vector<8x128xf32>
    %cst_50 = arith.constant dense<0xFF800000> : vector<8xf32>
    %167 = vector.multi_reduction <maximumf>, %166, %cst_50 [1] : vector<8x128xf32> to vector<8xf32>
    %168 = vector.shape_cast %167 : vector<8xf32> to vector<8x1xf32>
    %169 = vector.broadcast %168 : vector<8x1xf32> to vector<8x128xf32>
    %170 = arith.subf %166, %169 : vector<8x128xf32>
    %171 = math.exp %170 : vector<8x128xf32>
    %cst_51 = arith.constant dense<0.000000e+00> : vector<8xf32>
    %172 = vector.multi_reduction <add>, %171, %cst_51 [1] : vector<8x128xf32> to vector<8xf32>
    %173 = vector.shape_cast %172 : vector<8xf32> to vector<8x1xf32>
    %174 = vector.broadcast %173 : vector<8x1xf32> to vector<8x128xf32>
    %175 = arith.divf %171, %174 : vector<8x128xf32>
    %176 = vector.extract_strided_slice %2 {offsets = [0, 7], sizes = [8, 1], strides = [1, 1]} : vector<8x8xf32> to vector<8x1xf32>
    %177 = math.exp %175 : vector<8x128xf32>
    %178 = vector.broadcast %176 : vector<8x1xf32> to vector<8x128xf32>
    %179 = arith.mulf %178, %177 : vector<8x128xf32>
    %180 = arith.addf %159, %179 : vector<8x128xf32>
    %cst_52 = arith.constant 0.000000e+00 : f32
    %181 = vector.broadcast %cst_52 : f32 to vector<8x128xf32>
    %182 = arith.cmpf oeq, %180, %181 : vector<8x128xf32>
    %cst_53 = arith.constant 2.22044605E-16 : f32
    %183 = vector.broadcast %cst_53 : f32 to vector<8x128xf32>
    %184 = arith.select %182, %183, %180 : vector<8x128xi1>, vector<8x128xf32>
    %185 = math.log %184 : vector<8x128xf32>
    %c0_54 = arith.constant 0 : index
    %c0_55 = arith.constant 0 : index
    %186 = vector.load %arg7[%c0_54, %c0_55] : memref<8x128xf32, #tpu.memory_space<vmem>>, vector<8x128xf32>
    tpu.vector_store %arg7[%c0_54, %c0_55], %185 {strides = array<i32>} : memref<8x128xf32, #tpu.memory_space<vmem>>, vector<8x128xf32>,
    return
  }
  func.func @transform_0(%arg0: i32) -> (i32, i32) {
    %c0_i32 = arith.constant 0 : i32
    %c0_i32_0 = arith.constant 0 : i32
    return %arg0, %c0_i32 : i32, i32
  }
  func.func @transform_1(%arg0: i32) -> (i32, i32) {
    %c0_i32 = arith.constant 0 : i32
    %c0_i32_0 = arith.constant 0 : i32
    return %arg0, %c0_i32 : i32, i32
  }
  func.func @transform_2(%arg0: i32) -> (i32, i32) {
    %c0_i32 = arith.constant 0 : i32
    %c0_i32_0 = arith.constant 0 : i32
    %c0_i32_1 = arith.constant 0 : i32
    return %c0_i32, %c0_i32_0 : i32, i32
  }
  func.func @transform_3(%arg0: i32) -> (i32, i32) {
    %c0_i32 = arith.constant 0 : i32
    %c0_i32_0 = arith.constant 0 : i32
    %c0_i32_1 = arith.constant 0 : i32
    return %c0_i32, %c0_i32_0 : i32, i32
  }
  func.func @transform_4(%arg0: i32) -> (i32, i32, i32) {
    %c0_i32 = arith.constant 0 : i32
    %c0_i32_0 = arith.constant 0 : i32
    %c0_i32_1 = arith.constant 0 : i32
    %c0_i32_2 = arith.constant 0 : i32
    return %c0_i32, %c0_i32_0, %c0_i32_1 : i32, i32, i32
  }
  func.func @transform_5(%arg0: i32) -> (i32, i32) {
    %c0_i32 = arith.constant 0 : i32
    %c0_i32_0 = arith.constant 0 : i32
    %c0_i32_1 = arith.constant 0 : i32
    return %c0_i32, %c0_i32_0 : i32, i32
  }
  func.func @transform_6(%arg0: i32) -> (i32, i32) {
    %c0_i32 = arith.constant 0 : i32
    %c0_i32_0 = arith.constant 0 : i32
    return %arg0, %c0_i32 : i32, i32
  }
}

</mosaic_0001>

<llo_original>
// kernel: moe_forward.2
$region0: #{moe_forward.2}
  #allocation0 [shape = 'u32[]', space=smem, size = 0x4, offset = 0x4, fixed_abs, tag = 'smem constant byte address 0x4 - core index']
  #allocation1 [shape = 'u32[72,128]{1,0:T(1,128)}', space=vmem, size = 0x9000, scoped, tag = 'internal scratch']
  #allocation2 [shape = 'f32[1]{0:T(128)S(6)}', space=smem, size = 0x200, scoped, tag = 'scoped memory for moe_forward.2']
  %s0 = inlined_call_operand.vmem [shape: f32[16,32], index: 0, kind: input, shape index: {}]
  %s1 = inlined_call_operand.vmem [shape: bf16[32,16], index: 1, kind: input, shape index: {}]
  %s2 = inlined_call_operand.vmem [shape: f32[16,8], index: 2, kind: input, shape index: {}]
  %s3 = inlined_call_operand.<no memory space> [shape: f32[1], index: 3, kind: input, shape index: {}]
  %s4 = inlined_call_operand.vmem [shape: f32[16,128], index: 4, kind: output, shape index: {}]
  %s5 = sld [smem:[#allocation0]]
  $region49: #{moe_forward.2} parent=0
    _
  %s7 = ssub.s32 1, %s5
  %s8 = scalar_select 0, %s7, %s5
  %9 = sst [smem:[#allocation2]] %s3
  loop: start=0, step=1, limit=4
  $region2: #{moe_forward.2} parent=0 // loop_pre_header
    _
  $region3: #{moe_forward.2} parent=0 // loop_header
    %s11 = sphi 0, %s15
    %p12 = scmp.ge.s32.totalorder %s11, 4
    %s21 = sphi 0, %s23
    %s24 = sphi 0, %s21
    %s25 = sphi 0, %s24
    %s41 = sphi 0, %s25
    %s45 = sphi 0, %s45
    %s47 = sphi 0, %s45
    %s48 = sphi 0, %s47
    %s62 = sphi 0, %s48
    %s68 = sphi 0, %s70
    %s71 = sphi 0, %s68
    %s72 = sphi 0, %s71
    %s88 = sphi 0, %s72
    %s92 = sphi 0, %s92
    %s94 = sphi 0, %s92
    %s95 = sphi 0, %s94
    %s109 = sphi 0, %s95
    %s115 = sphi 0, %s117
    %s118 = sphi 0, %s115
    %s119 = sphi 0, %s118
    %s135 = sphi 0, %s119
  $region4: #{moe_forward.2} parent=0 // loop_header_branch
    %14 = sbr.rel (%p12) target = $region8
  $region5: #{moe_forward.2} parent=0 // loop_body
    %s16 = ssub.s32 %s11, 1
    %s17 = ssub.s32 %s11, 2
    %s18 = sadd.s32 %s11, 1
    %s19 = ssub.s32 %s11, %s18
    %p20 = scmp.eq.s32.totalorder %s19, 0
    %s22 = sadd.s32 %s21, 1
    %s23 = scalar_select %p20, %s21, %s22
    %p26 = pneg %p20
    %p27 = scmp.eq.s32.totalorder %s11, 1
    %p28 = por %p26, %p27
    %p29 = scmp.ne.s32.totalorder %s21, %s24
    %p30 = scmp.eq.s32.totalorder %s11, 0
    %p31 = por %p29, %p30
    %p32 = scmp.ne.s32.totalorder %s21, %s24
    %p33 = scmp.eq.s32.totalorder %s16, 1
    %p34 = por %p32, %p33
    %p35 = scmp.ne.s32.totalorder %s24, %s25
    %p36 = scmp.eq.s32.totalorder %s16, 0
    %p37 = por %p35, %p36
    %p38 = scmp.ne.s32.totalorder %s24, %s25
    %p39 = scmp.eq.s32.totalorder %s17, 1
    %p40 = por %p38, %p39
    %p42 = scmp.ne.s32.totalorder %s25, %s41
    %p43 = scmp.eq.s32.totalorder %s17, 0
    %p44 = por %p42, %p43
    %s46 = sadd.s32 %s45, 1
    %p49 = scmp.eq.s32.totalorder %s11, 1
    %p50 = scmp.ne.s32.totalorder %s45, %s47
    %p51 = scmp.eq.s32.totalorder %s11, 0
    %p52 = por %p50, %p51
    %p53 = scmp.ne.s32.totalorder %s45, %s47
    %p54 = scmp.eq.s32.totalorder %s16, 1
    %p55 = por %p53, %p54
    %p56 = scmp.ne.s32.totalorder %s47, %s48
    %p57 = scmp.eq.s32.totalorder %s16, 0
    %p58 = por %p56, %p57
    %p59 = scmp.ne.s32.totalorder %s47, %s48
    %p60 = scmp.eq.s32.totalorder %s17, 1
    %p61 = por %p59, %p60
    %p63 = scmp.ne.s32.totalorder %s48, %s62
    %p64 = scmp.eq.s32.totalorder %s17, 0
    %p65 = por %p63, %p64
    %s66 = ssub.s32 %s11, %s18
    %p67 = scmp.eq.s32.totalorder %s66, 0
    %s69 = sadd.s32 %s68, 1
    %s70 = scalar_select %p67, %s68, %s69
    %p73 = pneg %p67
    %p74 = scmp.eq.s32.totalorder %s11, 1
    %p75 = por %p73, %p74
    %p76 = scmp.ne.s32.totalorder %s68, %s71
    %p77 = scmp.eq.s32.totalorder %s11, 0
    %p78 = por %p76, %p77
    %p79 = scmp.ne.s32.totalorder %s68, %s71
    %p80 = scmp.eq.s32.totalorder %s16, 1
    %p81 = por %p79, %p80
    %p82 = scmp.ne.s32.totalorder %s71, %s72
    %p83 = scmp.eq.s32.totalorder %s16, 0
    %p84 = por %p82, %p83
    %p85 = scmp.ne.s32.totalorder %s71, %s72
    %p86 = scmp.eq.s32.totalorder %s17, 1
    %p87 = por %p85, %p86
    %p89 = scmp.ne.s32.totalorder %s72, %s88
    %p90 = scmp.eq.s32.totalorder %s17, 0
    %p91 = por %p89, %p90
    %s93 = sadd.s32 %s92, 1
    %p96 = scmp.eq.s32.totalorder %s11, 1
    %p97 = scmp.ne.s32.totalorder %s92, %s94
    %p98 = scmp.eq.s32.totalorder %s11, 0
    %p99 = por %p97, %p98
    %p100 = scmp.ne.s32.totalorder %s92, %s94
    %p101 = scmp.eq.s32.totalorder %s16, 1
    %p102 = por %p100, %p101
    %p103 = scmp.ne.s32.totalorder %s94, %s95
    %p104 = scmp.eq.s32.totalorder %s16, 0
    %p105 = por %p103, %p104
    %p106 = scmp.ne.s32.totalorder %s94, %s95
    %p107 = scmp.eq.s32.totalorder %s17, 1
    %p108 = por %p106, %p107
    %p110 = scmp.ne.s32.totalorder %s95, %s109
    %p111 = scmp.eq.s32.totalorder %s17, 0
    %p112 = por %p110, %p111
    %s113 = ssub.s32 %s11, %s18
    %p114 = scmp.eq.s32.totalorder %s113, 0
    %s116 = sadd.s32 %s115, 1
    %s117 = scalar_select %p114, %s115, %s116
    %p120 = pneg %p114
    %p121 = scmp.eq.s32.totalorder %s11, 1
    %p122 = por %p120, %p121
    %p123 = scmp.ne.s32.totalorder %s115, %s118
    %p124 = scmp.eq.s32.totalorder %s11, 0
    %p125 = por %p123, %p124
    %p126 = scmp.ne.s32.totalorder %s115, %s118
    %p127 = scmp.eq.s32.totalorder %s16, 1
    %p128 = por %p126, %p127
    %p129 = scmp.ne.s32.totalorder %s118, %s119
    %p130 = scmp.eq.s32.totalorder %s16, 0
    %p131 = por %p129, %p130
    %p132 = scmp.ne.s32.totalorder %s118, %s119
    %p133 = scmp.eq.s32.totalorder %s17, 1
    %p134 = por %p132, %p133
    %p136 = scmp.ne.s32.totalorder %s119, %s135
    %p137 = scmp.eq.s32.totalorder %s17, 0
    %p138 = por %p136, %p137
    %p139 = scmp.le.s32.totalorder 1, %s11
    %p140 = scmp.lt.s32.totalorder %s11, 3
    %p141 = pnand %p139, %p140
    %p142 = pneg %p141
    // Predicated region
    $region9: #{moe_forward.2} parent=5 // pred_check
      _
    $region10: #{moe_forward.2} parent=5 // pred_check_branch
      %144 = sbr.rel (%p141) target = $region12
    $region11: #{moe_forward.2} parent=5 // pred_region
      %s145 = ssub.s32 %s11, 1
      // Predicated region
      $region13: #{moe_forward.2} parent=11 // pred_check
        %p146 = pneg %p58
      $region14: #{moe_forward.2} parent=11 // pred_check_branch
        %148 = sbr.rel (%p146) target = $region16
      $region15: #{moe_forward.2} parent=11 // pred_region
        _
      $region16: #{moe_forward.2} parent=11 // pred_fallthru
        _
      // Predicated region
      $region17: #{moe_forward.2} parent=11 // pred_check
        %p149 = pneg %p105
      $region18: #{moe_forward.2} parent=11 // pred_check_branch
        %151 = sbr.rel (%p149) target = $region20
      $region19: #{moe_forward.2} parent=11 // pred_region
        _
      $region20: #{moe_forward.2} parent=11 // pred_fallthru
        _
    $region12: #{moe_forward.2} parent=5 // pred_fallthru
      _
    %p152 = scmp.lt.s32.totalorder %s11, 2
    // Predicated region
    $region21: #{moe_forward.2} parent=5 // pred_check
      %p153 = pneg %p152
    $region22: #{moe_forward.2} parent=5 // pred_check_branch
      %155 = sbr.rel (%p153) target = $region24
    $region23: #{moe_forward.2} parent=5 // pred_region
      // Predicated region
      $region25: #{moe_forward.2} parent=23 // pred_check
        %p156 = pneg %p31
      $region26: #{moe_forward.2} parent=23 // pred_check_branch
        %158 = sbr.rel (%p156) target = $region28
      $region27: #{moe_forward.2} parent=23 // pred_region
        %p159 = scmp.lt.s32.totalorder %s11, 1
        %s160 = scalar_select %p159, %s11, 1
        %s161 = smul.addr %s160, 8
        %s162 = scalar_lea.vmem %s0, %s161
      $region28: #{moe_forward.2} parent=23 // pred_fallthru
        _
      // Predicated region
      $region29: #{moe_forward.2} parent=23 // pred_check
        %p163 = pneg %p78
      $region30: #{moe_forward.2} parent=23 // pred_check_branch
        %165 = sbr.rel (%p163) target = $region32
      $region31: #{moe_forward.2} parent=23 // pred_region
        %p166 = scmp.lt.s32.totalorder %s11, 1
        %s167 = scalar_select %p166, %s11, 1
        %s168 = smul.addr %s167, 8
        %s169 = scalar_lea.vmem %s2, %s168
      $region32: #{moe_forward.2} parent=23 // pred_fallthru
        _
    $region24: #{moe_forward.2} parent=5 // pred_fallthru
      _
    %p170 = scmp.le.s32.totalorder 1, %s11
    %p171 = scmp.lt.s32.totalorder %s11, 3
    %p172 = pnand %p170, %p171
    %p173 = pneg %p172
    // Predicated region
    $region33: #{moe_forward.2} parent=5 // pred_check
      _
    $region34: #{moe_forward.2} parent=5 // pred_check_branch
      %175 = sbr.rel (%p172) target = $region36
    $region35: #{moe_forward.2} parent=5 // pred_region
      %s176 = ssub.s32 %s11, 1
      %p177 = scmp.lt.s32.totalorder %s16, 1
      %s178 = scalar_select %p177, %s16, 1
      %s179 = smul.addr %s178, 8
      %s180 = scalar_lea.vmem %s0, %s179
      %p181 = pneg %p37
      %p182 = pneg %p34
      %p183 = pneg %p58
      %p184 = pneg %p55
      %p185 = scmp.lt.s32.totalorder %s16, 1
      %s186 = scalar_select %p185, %s16, 1
      %s187 = smul.addr %s186, 8
      %s188 = scalar_lea.vmem %s2, %s187
      %p189 = pneg %p84
      %p190 = pneg %p81
      %p191 = pneg %p105
      %p192 = pneg %p102
      %p193 = pneg %p131
      %p194 = pneg %p128
      %p195 = scmp.lt.s32.totalorder %s16, 1
      %s196 = scalar_select %p195, %s16, 1
      %s197 = smul.addr %s196, 8
      %s198 = scalar_lea.vmem %s4, %s197
      %p199 = scmp.lt.s32.totalorder %s16, 1
      %s200 = scalar_select %p199, %s16, 1
      %s201 = smul.addr %s200, 8
      %s202 = scalar_lea.vmem %s0, %s201
      %p203 = scmp.lt.s32.totalorder %s16, 1
      %s204 = scalar_select %p203, %s16, 1
      %s205 = smul.addr %s204, 8
      %s206 = scalar_lea.vmem %s2, %s205
      %p207 = scmp.lt.s32.totalorder %s16, 1
      %s208 = scalar_select %p207, %s16, 1
      %s209 = smul.addr %s208, 8
      %s210 = scalar_lea.vmem %s4, %s209
      %v212 = vld [vmem:[%s202] sm:$0xff]
      %v213 = vpack.c.bf16 %v212, %v212
      %v214 = vld [vmem:[%s1] sm:$0xf]
      %v215 = vld [vmem:[%s1 + $0x4] sm:$0xf]
      %v216 = vld [vmem:[%s1 + $0x8] sm:$0xf]
      %v217 = vld [vmem:[%s1 + $0xc] sm:$0xf]
      %v222 = vunpack.c.l.b16 %v214
      %v223 = vunpack.c.l.b16 %v215
      %v224 = vunpack.c.l.b16 %v216
      %v225 = vunpack.c.l.b16 %v217
      %v226 = vpack.c.b16 %v223, %v222
      %v227 = vpack.c.b16 %v225, %v224
      %vm230 = vcmask 261120
      %v232 = vsel %vm230, %v213, 0
      %234 = vmatpush.bf16.msra.mxu0 0
      %235 = vmatpush.bf16.msra.mxu0 0
      %236 = vmatpush.bf16.msra.mxu0 0
      %237 = vmatpush.bf16.msra.mxu0 0
      %238 = vmatpush.bf16.msra.mxu0 0
      %239 = vmatpush.bf16.msra.mxu0 0
      %240 = vmatpush.bf16.msra.mxu0 %v227
      %241 = vmatpush.bf16.msra.mxu0 %v226
      %242 = vmatmul.bf16.gmra.mxu0 %v232
      %v243 = vpop.f32.mrf.mxu0
      %v244 = vadd.f32 0.0, %v243
      %v245 = vpop.f32.mrf.mxu0
      %246 = vdwg.mxu0
      %v247 = vmax.f32 %v244, 0.0
      %vm248 = vcmp.ne.f32.partialorder %v244, %v244
      %v249 = vadd.f32 %v244, 0.0
      %v250 = vand.u32 2147483647, %v244
      %v251 = vsub.f32 0.0, %v250
      %v252 = vmul.f32 %v251, 1.442695
      %v253 = vpow.pop %v252
      %v254 = vadd.f32 %v253, 1.0
      %v255 = vlog2.pop %v254
      %v256 = vmul.f32 %v255, 0.6931472
      %v257 = vmul.f32 -0.5, %v253
      %v258 = vadd.f32 %v257, 1.0
      %v259 = vmul.f32 %v258, %v253
      %v260 = vand.u32 2147483647, %v253
      %vm261 = vcmp.lt.f32.partialorder %v260, 0.0004427343
      %v262 = vsel %vm261, %v259, %v256
      %v263 = vadd.f32 %v247, %v262
      %v264 = vsel %vm248, %v249, %v263
      %v265 = vadd.f32 %v264, 1e-10
      %s266 = sld [smem:[#allocation2]]
      %v267 = vstv %s266
      %v268 = vmul.f32 %v265, %v267
      %v269 = vld [vmem:[%s206] sm:$0xff]
      %271 = vrot.lane.b32.xlu0 %v268, 120
      %v272 = vpop.permute.xlu0 %271
      %v274 = vmul.f32 %v269, %v272
      %v275 = vadd.f32 %v244, %v274
      %277 = vrot.lane.b32.xlu0 %v275, 8
      %v278 = vpop.permute.xlu0 %277
      %280 = vrot.lane.b32.xlu0 %v268, 8
      %v281 = vpop.permute.xlu0 %280
      %vm283 = vcmask 64512
      %v284 = vsel %vm283, %v244, %v278
      %vm285 = vcmask 130048
      %v286 = vsel %vm285, %v284, %v281
      %vm287 = vcmask 195584
      %v288 = vsel %vm287, %v286, 0.0
      %289 = vst [vmem:[%s210] sm:$0xff] %v288
      %p290 = scmp.lt.s32.totalorder %s16, 1
      %s291 = scalar_select %p290, %s16, 1
      %s292 = smul.addr %s291, 8
      %s293 = scalar_lea.vmem %s4, %s292
      // Predicated region
      $region37: #{moe_forward.2} parent=35 // pred_check
        %p294 = pneg %p128
      $region38: #{moe_forward.2} parent=35 // pred_check_branch
        %296 = sbr.rel (%p294) target = $region40
      $region39: #{moe_forward.2} parent=35 // pred_region
        _
      $region40: #{moe_forward.2} parent=35 // pred_fallthru
        _
    $region36: #{moe_forward.2} parent=5 // pred_fallthru
      _
    %p297 = scmp.le.s32.totalorder 2, %s11
    // Predicated region
    $region41: #{moe_forward.2} parent=5 // pred_check
      %p298 = pneg %p297
    $region42: #{moe_forward.2} parent=5 // pred_check_branch
      %300 = sbr.rel (%p298) target = $region44
    $region43: #{moe_forward.2} parent=5 // pred_region
      %s301 = ssub.s32 %s11, 2
      // Predicated region
      $region45: #{moe_forward.2} parent=43 // pred_check
        %p302 = pneg %p134
      $region46: #{moe_forward.2} parent=43 // pred_check_branch
        %304 = sbr.rel (%p302) target = $region48
      $region47: #{moe_forward.2} parent=43 // pred_region
        %p305 = scmp.lt.s32.totalorder %s17, 1
        %s306 = scalar_select %p305, %s17, 1
        %s307 = smul.addr %s306, 8
        %s308 = scalar_lea.vmem %s4, %s307
      $region48: #{moe_forward.2} parent=43 // pred_fallthru
        _
    $region44: #{moe_forward.2} parent=5 // pred_fallthru
      _
  $region6: #{moe_forward.2} parent=0 // loop_footer
    %s15 = sadd.s32 1, %s11
  $region7: #{moe_forward.2} parent=0 // loop_footer_branch
    %10 = sbr.rel target = $region3
  $region8: #{moe_forward.2} parent=0 // loop_exit
    _

// kernel: moe_forward.3
$region0: #{moe_forward.3}
  #allocation0 [shape = 'u32[]', space=smem, size = 0x4, offset = 0x4, fixed_abs, tag = 'smem constant byte address 0x4 - core index']
  #allocation1 [shape = 'u32[72,128]{1,0:T(1,128)}', space=vmem, size = 0x9000, scoped, tag = 'internal scratch']
  %s0 = inlined_call_operand.vmem [shape: f32[16,32], index: 0, kind: input, shape index: {}]
  %s1 = inlined_call_operand.vmem [shape: f32[16,8], index: 1, kind: input, shape index: {}]
  %s2 = inlined_call_operand.vmem [shape: bf16[32,256], index: 2, kind: input, shape index: {}]
  %s3 = inlined_call_operand.vmem [shape: f32[1,256], index: 3, kind: input, shape index: {}]
  %s4 = inlined_call_operand.vmem [shape: bf16[8,32,128], index: 4, kind: input, shape index: {}]
  %s5 = inlined_call_operand.vmem [shape: f32[8,128], index: 5, kind: input, shape index: {}]
  %s6 = inlined_call_operand.hbm [shape: f32[16,128], index: 6, kind: output, shape index: {}]
  %s7 = sld [smem:[#allocation0]]
  $region57: #{moe_forward.3} parent=0
    _
  %s9 = ssub.s32 1, %s7
  %s10 = scalar_select 0, %s9, %s7
  $region1: #{moe_forward.3} parent=0
    #allocation2 [shape = 'u8[8192]{0}', space=vmem, size = 0x2000, scoped, tag = 'output window, operand 0']
    #allocation3 [shape = 's32[2]{0}', space=sflag, size = 0x8, scoped, tag = 'scoped memory for moe_forward.3']
    %11 = vsyncpa [#allocation3], 0
    %s12 = scalar_lea.sflag [#allocation3], 1
    %13 = vsyncpa %s12, 0
    loop: start=0, step=1, limit=4
    $region2: #{moe_forward.3} parent=1 // loop_pre_header
      _
    $region3: #{moe_forward.3} parent=1 // loop_header
      %s15 = sphi 0, %s19
      %p16 = scmp.ge.s32.totalorder %s15, 4
      %s25 = sphi 0, %s27
      %s28 = sphi 0, %s25
      %s29 = sphi 0, %s28
      %s45 = sphi 0, %s29
      %s51 = sphi 0, %s53
      %s54 = sphi 0, %s51
      %s55 = sphi 0, %s54
      %s71 = sphi 0, %s55
      %s75 = sphi 0, %s75
      %s77 = sphi 0, %s75
      %s78 = sphi 0, %s77
      %s92 = sphi 0, %s78
      %s96 = sphi 0, %s96
      %s98 = sphi 0, %s96
      %s99 = sphi 0, %s98
      %s113 = sphi 0, %s99
      %s117 = sphi 0, %s117
      %s119 = sphi 0, %s117
      %s120 = sphi 0, %s119
      %s134 = sphi 0, %s120
      %s138 = sphi 0, %s138
      %s140 = sphi 0, %s138
      %s141 = sphi 0, %s140
      %s155 = sphi 0, %s141
      %s161 = sphi 0, %s163
      %s164 = sphi 0, %s161
      %s165 = sphi 0, %s164
      %s181 = sphi 0, %s165
    $region4: #{moe_forward.3} parent=1 // loop_header_branch
      %18 = sbr.rel (%p16) target = $region8
    $region5: #{moe_forward.3} parent=1 // loop_body
      %s20 = ssub.s32 %s15, 1
      %s21 = ssub.s32 %s15, 2
      %s22 = sadd.s32 %s15, 1
      %s23 = ssub.s32 %s15, %s22
      %p24 = scmp.eq.s32.totalorder %s23, 0
      %s26 = sadd.s32 %s25, 1
      %s27 = scalar_select %p24, %s25, %s26
      %p30 = pneg %p24
      %p31 = scmp.eq.s32.totalorder %s15, 1
      %p32 = por %p30, %p31
      %p33 = scmp.ne.s32.totalorder %s25, %s28
      %p34 = scmp.eq.s32.totalorder %s15, 0
      %p35 = por %p33, %p34
      %p36 = scmp.ne.s32.totalorder %s25, %s28
      %p37 = scmp.eq.s32.totalorder %s20, 1
      %p38 = por %p36, %p37
      %p39 = scmp.ne.s32.totalorder %s28, %s29
      %p40 = scmp.eq.s32.totalorder %s20, 0
      %p41 = por %p39, %p40
      %p42 = scmp.ne.s32.totalorder %s28, %s29
      %p43 = scmp.eq.s32.totalorder %s21, 1
      %p44 = por %p42, %p43
      %p46 = scmp.ne.s32.totalorder %s29, %s45
      %p47 = scmp.eq.s32.totalorder %s21, 0
      %p48 = por %p46, %p47
      %s49 = ssub.s32 %s15, %s22
      %p50 = scmp.eq.s32.totalorder %s49, 0
      %s52 = sadd.s32 %s51, 1
      %s53 = scalar_select %p50, %s51, %s52
      %p56 = pneg %p50
      %p57 = scmp.eq.s32.totalorder %s15, 1
      %p58 = por %p56, %p57
      %p59 = scmp.ne.s32.totalorder %s51, %s54
      %p60 = scmp.eq.s32.totalorder %s15, 0
      %p61 = por %p59, %p60
      %p62 = scmp.ne.s32.totalorder %s51, %s54
      %p63 = scmp.eq.s32.totalorder %s20, 1
      %p64 = por %p62, %p63
      %p65 = scmp.ne.s32.totalorder %s54, %s55
      %p66 = scmp.eq.s32.totalorder %s20, 0
      %p67 = por %p65, %p66
      %p68 = scmp.ne.s32.totalorder %s54, %s55
      %p69 = scmp.eq.s32.totalorder %s21, 1
      %p70 = por %p68, %p69
      %p72 = scmp.ne.s32.totalorder %s55, %s71
      %p73 = scmp.eq.s32.totalorder %s21, 0
      %p74 = por %p72, %p73
      %s76 = sadd.s32 %s75, 1
      %p79 = scmp.eq.s32.totalorder %s15, 1
      %p80 = scmp.ne.s32.totalorder %s75, %s77
      %p81 = scmp.eq.s32.totalorder %s15, 0
      %p82 = por %p80, %p81
      %p83 = scmp.ne.s32.totalorder %s75, %s77
      %p84 = scmp.eq.s32.totalorder %s20, 1
      %p85 = por %p83, %p84
      %p86 = scmp.ne.s32.totalorder %s77, %s78
      %p87 = scmp.eq.s32.totalorder %s20, 0
      %p88 = por %p86, %p87
      %p89 = scmp.ne.s32.totalorder %s77, %s78
      %p90 = scmp.eq.s32.totalorder %s21, 1
      %p91 = por %p89, %p90
      %p93 = scmp.ne.s32.totalorder %s78, %s92
      %p94 = scmp.eq.s32.totalorder %s21, 0
      %p95 = por %p93, %p94
      %s97 = sadd.s32 %s96, 1
      %p100 = scmp.eq.s32.totalorder %s15, 1
      %p101 = scmp.ne.s32.totalorder %s96, %s98
      %p102 = scmp.eq.s32.totalorder %s15, 0
      %p103 = por %p101, %p102
      %p104 = scmp.ne.s32.totalorder %s96, %s98
      %p105 = scmp.eq.s32.totalorder %s20, 1
      %p106 = por %p104, %p105
      %p107 = scmp.ne.s32.totalorder %s98, %s99
      %p108 = scmp.eq.s32.totalorder %s20, 0
      %p109 = por %p107, %p108
      %p110 = scmp.ne.s32.totalorder %s98, %s99
      %p111 = scmp.eq.s32.totalorder %s21, 1
      %p112 = por %p110, %p111
      %p114 = scmp.ne.s32.totalorder %s99, %s113
      %p115 = scmp.eq.s32.totalorder %s21, 0
      %p116 = por %p114, %p115
      %s118 = sadd.s32 %s117, 1
      %p121 = scmp.eq.s32.totalorder %s15, 1
      %p122 = scmp.ne.s32.totalorder %s117, %s119
      %p123 = scmp.eq.s32.totalorder %s15, 0
      %p124 = por %p122, %p123
      %p125 = scmp.ne.s32.totalorder %s117, %s119
      %p126 = scmp.eq.s32.totalorder %s20, 1
      %p127 = por %p125, %p126
      %p128 = scmp.ne.s32.totalorder %s119, %s120
      %p129 = scmp.eq.s32.totalorder %s20, 0
      %p130 = por %p128, %p129
      %p131 = scmp.ne.s32.totalorder %s119, %s120
      %p132 = scmp.eq.s32.totalorder %s21, 1
      %p133 = por %p131, %p132
      %p135 = scmp.ne.s32.totalorder %s120, %s134
      %p136 = scmp.eq.s32.totalorder %s21, 0
      %p137 = por %p135, %p136
      %s139 = sadd.s32 %s138, 1
      %p142 = scmp.eq.s32.totalorder %s15, 1
      %p143 = scmp.ne.s32.totalorder %s138, %s140
      %p144 = scmp.eq.s32.totalorder %s15, 0
      %p145 = por %p143, %p144
      %p146 = scmp.ne.s32.totalorder %s138, %s140
      %p147 = scmp.eq.s32.totalorder %s20, 1
      %p148 = por %p146, %p147
      %p149 = scmp.ne.s32.totalorder %s140, %s141
      %p150 = scmp.eq.s32.totalorder %s20, 0
      %p151 = por %p149, %p150
      %p152 = scmp.ne.s32.totalorder %s140, %s141
      %p153 = scmp.eq.s32.totalorder %s21, 1
      %p154 = por %p152, %p153
      %p156 = scmp.ne.s32.totalorder %s141, %s155
      %p157 = scmp.eq.s32.totalorder %s21, 0
      %p158 = por %p156, %p157
      %s159 = ssub.s32 %s15, %s22
      %p160 = scmp.eq.s32.totalorder %s159, 0
      %s162 = sadd.s32 %s161, 1
      %s163 = scalar_select %p160, %s161, %s162
      %p166 = pneg %p160
      %p167 = scmp.eq.s32.totalorder %s15, 1
      %p168 = por %p166, %p167
      %p169 = scmp.ne.s32.totalorder %s161, %s164
      %p170 = scmp.eq.s32.totalorder %s15, 0
      %p171 = por %p169, %p170
      %p172 = scmp.ne.s32.totalorder %s161, %s164
      %p173 = scmp.eq.s32.totalorder %s20, 1
      %p174 = por %p172, %p173
      %p175 = scmp.ne.s32.totalorder %s164, %s165
      %p176 = scmp.eq.s32.totalorder %s20, 0
      %p177 = por %p175, %p176
      %p178 = scmp.ne.s32.totalorder %s164, %s165
      %p179 = scmp.eq.s32.totalorder %s21, 1
      %p180 = por %p178, %p179
      %p182 = scmp.ne.s32.totalorder %s165, %s181
      %p183 = scmp.eq.s32.totalorder %s21, 0
      %p184 = por %p182, %p183
      %p185 = scmp.le.s32.totalorder 1, %s15
      %p186 = scmp.lt.s32.totalorder %s15, 3
      %p187 = pnand %p185, %p186
      %p188 = pneg %p187
      // Predicated region
      $region9: #{moe_forward.3} parent=5 // pred_check
        _
      $region10: #{moe_forward.3} parent=5 // pred_check_branch
        %190 = sbr.rel (%p187) target = $region12
      $region11: #{moe_forward.3} parent=5 // pred_region
        %s191 = ssub.s32 %s15, 1
        // Predicated region
        $region13: #{moe_forward.3} parent=11 // pred_check
          %p192 = pneg %p88
        $region14: #{moe_forward.3} parent=11 // pred_check_branch
          %194 = sbr.rel (%p192) target = $region16
        $region15: #{moe_forward.3} parent=11 // pred_region
          _
        $region16: #{moe_forward.3} parent=11 // pred_fallthru
          _
        // Predicated region
        $region17: #{moe_forward.3} parent=11 // pred_check
          %p195 = pneg %p109
        $region18: #{moe_forward.3} parent=11 // pred_check_branch
          %197 = sbr.rel (%p195) target = $region20
        $region19: #{moe_forward.3} parent=11 // pred_region
          _
        $region20: #{moe_forward.3} parent=11 // pred_fallthru
          _
        // Predicated region
        $region21: #{moe_forward.3} parent=11 // pred_check
          %p198 = pneg %p130
        $region22: #{moe_forward.3} parent=11 // pred_check_branch
          %200 = sbr.rel (%p198) target = $region24
        $region23: #{moe_forward.3} parent=11 // pred_region
          _
        $region24: #{moe_forward.3} parent=11 // pred_fallthru
          _
        // Predicated region
        $region25: #{moe_forward.3} parent=11 // pred_check
          %p201 = pneg %p151
        $region26: #{moe_forward.3} parent=11 // pred_check_branch
          %203 = sbr.rel (%p201) target = $region28
        $region27: #{moe_forward.3} parent=11 // pred_region
          _
        $region28: #{moe_forward.3} parent=11 // pred_fallthru
          _
      $region12: #{moe_forward.3} parent=5 // pred_fallthru
        _
      %p204 = scmp.lt.s32.totalorder %s15, 2
      // Predicated region
      $region29: #{moe_forward.3} parent=5 // pred_check
        %p205 = pneg %p204
      $region30: #{moe_forward.3} parent=5 // pred_check_branch
        %207 = sbr.rel (%p205) target = $region32
      $region31: #{moe_forward.3} parent=5 // pred_region
        // Predicated region
        $region33: #{moe_forward.3} parent=31 // pred_check
          %p208 = pneg %p35
        $region34: #{moe_forward.3} parent=31 // pred_check_branch
          %210 = sbr.rel (%p208) target = $region36
        $region35: #{moe_forward.3} parent=31 // pred_region
          %p211 = scmp.lt.s32.totalorder %s15, 1
          %s212 = scalar_select %p211, %s15, 1
          %s213 = smul.addr %s212, 8
          %s214 = scalar_lea.vmem %s0, %s213
        $region36: #{moe_forward.3} parent=31 // pred_fallthru
          _
        // Predicated region
        $region37: #{moe_forward.3} parent=31 // pred_check
          %p215 = pneg %p61
        $region38: #{moe_forward.3} parent=31 // pred_check_branch
          %217 = sbr.rel (%p215) target = $region40
        $region39: #{moe_forward.3} parent=31 // pred_region
          %p218 = scmp.lt.s32.totalorder %s15, 1
          %s219 = scalar_select %p218, %s15, 1
          %s220 = smul.addr %s219, 8
          %s221 = scalar_lea.vmem %s1, %s220
        $region40: #{moe_forward.3} parent=31 // pred_fallthru
          _
      $region32: #{moe_forward.3} parent=5 // pred_fallthru
        _
      %p222 = scmp.le.s32.totalorder 1, %s15
      %p223 = scmp.lt.s32.totalorder %s15, 3
      %p224 = pnand %p222, %p223
      %p225 = pneg %p224
      // Predicated region
      $region41: #{moe_forward.3} parent=5 // pred_check
        _
      $region42: #{moe_forward.3} parent=5 // pred_check_branch
        %227 = sbr.rel (%p224) target = $region44
      $region43: #{moe_forward.3} parent=5 // pred_region
        %s228 = ssub.s32 %s15, 1
        %p229 = scmp.lt.s32.totalorder %s20, 1
        %s230 = scalar_select %p229, %s20, 1
        %s231 = smul.addr %s230, 8
        %s232 = scalar_lea.vmem %s0, %s231
        %p233 = pneg %p41
        %p234 = pneg %p38
        %p235 = scmp.lt.s32.totalorder %s20, 1
        %s236 = scalar_select %p235, %s20, 1
        %s237 = smul.addr %s236, 8
        %s238 = scalar_lea.vmem %s1, %s237
        %p239 = pneg %p67
        %p240 = pneg %p64
        %p241 = pneg %p88
        %p242 = pneg %p85
        %p243 = pneg %p109
        %p244 = pneg %p106
        %p245 = pneg %p130
        %p246 = pneg %p127
        %p247 = pneg %p151
        %p248 = pneg %p148
        %p249 = pneg %p177
        %p250 = pneg %p174
        %s251 = sand.u32 %s164, 1
        %s252 = scalar_lea.sflag [#allocation3], %s251
        %s253 = sand.u32 %s164, 1
        %s254 = smul.addr %s253, 8
        %s255 = scalar_lea.vmem [#allocation2], %s254
        %p256 = scmp.lt.s32.totalorder %s20, 1
        %s257 = scalar_select %p256, %s20, 1
        %s258 = smul.addr %s257, 8
        %s259 = scalar_lea.vmem %s0, %s258
        %p260 = scmp.lt.s32.totalorder %s20, 1
        %s261 = scalar_select %p260, %s20, 1
        %s262 = smul.addr %s261, 8
        %s263 = scalar_lea.vmem %s1, %s262
        %v265 = vld [vmem:[%s259] sm:$0xff]
        %v266 = vpack.c.bf16 %v265, %v265
        %v267 = vld [vmem:[%s263] sm:$0xff]
        %v268 = vld [vmem:[%s2] sm:$0xff]
        %v269 = vld [vmem:[%s2 + $0x8] sm:$0xff]
        %v270 = vld [vmem:[%s2 + $0x10] sm:$0xff]
        %v271 = vld [vmem:[%s2 + $0x18] sm:$0xff]
        %v272 = vld [vmem:[%s3] sm:$0x3]
        %v274 = vperm.slane %v272, 0
        %v275 = vperm.slane %v272, 1
        %v282 = vunpack.c.l.b16 %v268
        %v283 = vunpack.c.h.b16 %v268
        %v284 = vunpack.c.l.b16 %v269
        %v285 = vunpack.c.h.b16 %v269
        %v286 = vunpack.c.l.b16 %v270
        %v287 = vunpack.c.h.b16 %v270
        %v288 = vunpack.c.l.b16 %v271
        %v289 = vunpack.c.h.b16 %v271
        %v290 = vpack.c.b16 %v284, %v282
        %v291 = vpack.c.b16 %v285, %v283
        %v292 = vpack.c.b16 %v288, %v286
        %v293 = vpack.c.b16 %v289, %v287
        %vm298 = vcmask 261120
        %v300 = vsel %vm298, %v266, 0
        %302 = vmatpush.bf16.msra.mxu0 0
        %303 = vmatpush.bf16.msra.mxu0 0
        %304 = vmatpush.bf16.msra.mxu0 0
        %305 = vmatpush.bf16.msra.mxu0 0
        %306 = vmatpush.bf16.msra.mxu0 0
        %307 = vmatpush.bf16.msra.mxu0 0
        %308 = vmatpush.bf16.msra.mxu0 %v292
        %309 = vmatpush.bf16.msra.mxu0 %v290
        %310 = vmatmul.bf16.gmra.mxu0 %v300
        %v311 = vpop.f32.mrf.mxu0
        %v312 = vadd.f32 %v274, %v311
        %v313 = vpop.f32.mrf.mxu0
        %314 = vdwg.mxu0
        %315 = vmatpush.bf16.msra.mxu0 0
        %316 = vmatpush.bf16.msra.mxu0 0
        %317 = vmatpush.bf16.msra.mxu0 0
        %318 = vmatpush.bf16.msra.mxu0 0
        %319 = vmatpush.bf16.msra.mxu0 0
        %320 = vmatpush.bf16.msra.mxu0 0
        %321 = vmatpush.bf16.msra.mxu0 %v293
        %322 = vmatpush.bf16.msra.mxu0 %v291
        %323 = vmatmul.bf16.gmra.mxu0 %v300
        %v324 = vpop.f32.mrf.mxu0
        %v325 = vadd.f32 %v275, %v324
        %v326 = vpop.f32.mrf.mxu0
        %327 = vdwg.mxu0
        %v328 = vmax.f32 %v312, 0.0
        %v329 = vmax.f32 %v325, 0.0
        %v330 = vpack.c.bf16 %v329, %v328
        %v331 = vld [vmem:[%s5] sm:$0xff]
        %v332 = vld [vmem:[%s4] sm:$0xf]
        %v333 = vld [vmem:[%s4 + $0x4] sm:$0xf]
        %v334 = vld [vmem:[%s4 + $0x8] sm:$0xf]
        %v335 = vld [vmem:[%s4 + $0xc] sm:$0xf]
        %v336 = vperm.slane %v331, 0
        %v341 = vunpack.c.l.b16 %v332
        %v342 = vunpack.c.l.b16 %v333
        %v343 = vunpack.c.l.b16 %v334
        %v344 = vunpack.c.l.b16 %v335
        %v345 = vpack.c.b16 %v342, %v341
        %v346 = vpack.c.b16 %v344, %v343
        %v350 = vsel %vm298, %v330, 0
        %352 = vmatpush.bf16.msra.mxu0 0
        %353 = vmatpush.bf16.msra.mxu0 0
        %354 = vmatpush.bf16.msra.mxu0 0
        %355 = vmatpush.bf16.msra.mxu0 0
        %356 = vmatpush.bf16.msra.mxu0 0
        %357 = vmatpush.bf16.msra.mxu0 0
        %358 = vmatpush.bf16.msra.mxu0 %v346
        %359 = vmatpush.bf16.msra.mxu0 %v345
        %360 = vmatmul.bf16.gmra.mxu0 %v350
        %v361 = vpop.f32.mrf.mxu0
        %v362 = vadd.f32 %v336, %v361
        %v363 = vpop.f32.mrf.mxu0
        %364 = vdwg.mxu0
        %365 = vmax.xlane.f32.xlu0 %v362
        %v366 = vpop.xlane.xlu0 %365
        %v367 = vsub.f32 %v362, %v366
        %v368 = vmul.f32 %v367, 1.442695
        %v369 = vpow.pop %v368
        %370 = vadd.xlane.f32.xlu0 %v369
        %v371 = vpop.xlane.xlu0 %370
        %v372 = vrcp.pop %v371
        %v373 = vmul.f32 %v371, %v372
        %v374 = vsub.f32 1.0, %v373
        %v375 = vmul.f32 %v372, %v374
        %v376 = vadd.f32 %v372, %v375
        %vm377 = vweird.f32 %v371
        %vm378 = vweird.f32 %v372
        %vm379 = vmor %vm377, %vm378
        %v380 = vsel %vm379, %v372, %v376
        %v381 = vand.u32 2147483647, %v371
        %vm382 = vcmp.eq.f32.partialorder %v381, 8.507059e+37
        %v383 = vand.u32 %v371, 2147483648
        %v384 = vor.u32 1.1754944e-38, %v383
        %v385 = vsel %vm382, %v384, %v380
        %v386 = vmul.f32 %v369, %v385
        %v387 = vmul.f32 %v386, 1.442695
        %v388 = vpow.pop %v387
        %390 = vset.pattern.permute.xlu0 0
        %391 = vperm.xlu0 %390, %v267
        %v392 = vpop.permute.xlu0 %391
        %v394 = vmul.f32 %v392, %v388
        %v395 = vadd.f32 %v394, 0.0
        %s396 = scalar_lea.vmem %s4, 16
        %v397 = vld [vmem:[%s396] sm:$0xf]
        %v398 = vld [vmem:[%s396 + $0x4] sm:$0xf]
        %v399 = vld [vmem:[%s396 + $0x8] sm:$0xf]
        %v400 = vld [vmem:[%s396 + $0xc] sm:$0xf]
        %v401 = vperm.slane %v331, 1
        %v403 = vunpack.c.l.b16 %v330
        %v404 = vpack.c.b16 %v403, %v403
        %405 = vrot.lane.b32.xlu0 %v404, 96
        %v406 = vpop.permute.xlu0 %405
        %v411 = vunpack.c.l.b16 %v397
        %v412 = vunpack.c.l.b16 %v398
        %v413 = vunpack.c.l.b16 %v399
        %v414 = vunpack.c.l.b16 %v400
        %v415 = vpack.c.b16 %v412, %v411
        %v416 = vpack.c.b16 %v414, %v413
        %v420 = vsel %vm298, %v406, 0
        %422 = vmatpush.bf16.msra.mxu0 0
        %423 = vmatpush.bf16.msra.mxu0 0
        %424 = vmatpush.bf16.msra.mxu0 0
        %425 = vmatpush.bf16.msra.mxu0 0
        %426 = vmatpush.bf16.msra.mxu0 0
        %427 = vmatpush.bf16.msra.mxu0 0
        %428 = vmatpush.bf16.msra.mxu0 %v416
        %429 = vmatpush.bf16.msra.mxu0 %v415
        %430 = vmatmul.bf16.gmra.mxu0 %v420
        %v431 = vpop.f32.mrf.mxu0
        %v432 = vadd.f32 %v401, %v431
        %v433 = vpop.f32.mrf.mxu0
        %434 = vdwg.mxu0
        %435 = vmax.xlane.f32.xlu0 %v432
        %v436 = vpop.xlane.xlu0 %435
        %v437 = vsub.f32 %v432, %v436
        %v438 = vmul.f32 %v437, 1.442695
        %v439 = vpow.pop %v438
        %440 = vadd.xlane.f32.xlu0 %v439
        %v441 = vpop.xlane.xlu0 %440
        %v442 = vrcp.pop %v441
        %v443 = vmul.f32 %v441, %v442
        %v444 = vsub.f32 1.0, %v443
        %v445 = vmul.f32 %v442, %v444
        %v446 = vadd.f32 %v442, %v445
        %vm447 = vweird.f32 %v441
        %vm448 = vweird.f32 %v442
        %vm449 = vmor %vm447, %vm448
        %v450 = vsel %vm449, %v442, %v446
        %v451 = vand.u32 2147483647, %v441
        %vm452 = vcmp.eq.f32.partialorder %v451, 8.507059e+37
        %v453 = vand.u32 %v441, 2147483648
        %v454 = vor.u32 1.1754944e-38, %v453
        %v455 = vsel %vm452, %v454, %v450
        %v456 = vmul.f32 %v439, %v455
        %v457 = vmul.f32 %v456, 1.442695
        %v458 = vpow.pop %v457
        %459 = vset.pattern.permute.xlu0 1
        %460 = vperm.xlu0 %459, %v267
        %v461 = vpop.permute.xlu0 %460
        %v463 = vmul.f32 %v461, %v458
        %v464 = vadd.f32 %v395, %v463
        %s465 = scalar_lea.vmem %s4, 32
        %v466 = vld [vmem:[%s465] sm:$0xf]
        %v467 = vld [vmem:[%s465 + $0x4] sm:$0xf]
        %v468 = vld [vmem:[%s465 + $0x8] sm:$0xf]
        %v469 = vld [vmem:[%s465 + $0xc] sm:$0xf]
        %v470 = vperm.slane %v331, 2
        %471 = vrot.lane.b32.xlu0 %v404, 64
        %v472 = vpop.permute.xlu0 %471
        %v477 = vunpack.c.l.b16 %v466
        %v478 = vunpack.c.l.b16 %v467
        %v479 = vunpack.c.l.b16 %v468
        %v480 = vunpack.c.l.b16 %v469
        %v481 = vpack.c.b16 %v478, %v477
        %v482 = vpack.c.b16 %v480, %v479
        %v486 = vsel %vm298, %v472, 0
        %488 = vmatpush.bf16.msra.mxu0 0
        %489 = vmatpush.bf16.msra.mxu0 0
        %490 = vmatpush.bf16.msra.mxu0 0
        %491 = vmatpush.bf16.msra.mxu0 0
        %492 = vmatpush.bf16.msra.mxu0 0
        %493 = vmatpush.bf16.msra.mxu0 0
        %494 = vmatpush.bf16.msra.mxu0 %v482
        %495 = vmatpush.bf16.msra.mxu0 %v481
        %496 = vmatmul.bf16.gmra.mxu0 %v486
        %v497 = vpop.f32.mrf.mxu0
        %v498 = vadd.f32 %v470, %v497
        %v499 = vpop.f32.mrf.mxu0
        %500 = vdwg.mxu0
        %501 = vmax.xlane.f32.xlu0 %v498
        %v502 = vpop.xlane.xlu0 %501
        %v503 = vsub.f32 %v498, %v502
        %v504 = vmul.f32 %v503, 1.442695
        %v505 = vpow.pop %v504
        %506 = vadd.xlane.f32.xlu0 %v505
        %v507 = vpop.xlane.xlu0 %506
        %v508 = vrcp.pop %v507
        %v509 = vmul.f32 %v507, %v508
        %v510 = vsub.f32 1.0, %v509
        %v511 = vmul.f32 %v508, %v510
        %v512 = vadd.f32 %v508, %v511
        %vm513 = vweird.f32 %v507
        %vm514 = vweird.f32 %v508
        %vm515 = vmor %vm513, %vm514
        %v516 = vsel %vm515, %v508, %v512
        %v517 = vand.u32 2147483647, %v507
        %vm518 = vcmp.eq.f32.partialorder %v517, 8.507059e+37
        %v519 = vand.u32 %v507, 2147483648
        %v520 = vor.u32 1.1754944e-38, %v519
        %v521 = vsel %vm518, %v520, %v516
        %v522 = vmul.f32 %v505, %v521
        %v523 = vmul.f32 %v522, 1.442695
        %v524 = vpow.pop %v523
        %525 = vset.pattern.permute.xlu0 2
        %526 = vperm.xlu0 %525, %v267
        %v527 = vpop.permute.xlu0 %526
        %v529 = vmul.f32 %v527, %v524
        %v530 = vadd.f32 %v464, %v529
        %s531 = scalar_lea.vmem %s4, 48
        %v532 = vld [vmem:[%s531] sm:$0xf]
        %v533 = vld [vmem:[%s531 + $0x4] sm:$0xf]
        %v534 = vld [vmem:[%s531 + $0x8] sm:$0xf]
        %v535 = vld [vmem:[%s531 + $0xc] sm:$0xf]
        %v536 = vperm.slane %v331, 3
        %537 = vrot.lane.b32.xlu0 %v404, 32
        %v538 = vpop.permute.xlu0 %537
        %v543 = vunpack.c.l.b16 %v532
        %v544 = vunpack.c.l.b16 %v533
        %v545 = vunpack.c.l.b16 %v534
        %v546 = vunpack.c.l.b16 %v535
        %v547 = vpack.c.b16 %v544, %v543
        %v548 = vpack.c.b16 %v546, %v545
        %v552 = vsel %vm298, %v538, 0
        %554 = vmatpush.bf16.msra.mxu0 0
        %555 = vmatpush.bf16.msra.mxu0 0
        %556 = vmatpush.bf16.msra.mxu0 0
        %557 = vmatpush.bf16.msra.mxu0 0
        %558 = vmatpush.bf16.msra.mxu0 0
        %559 = vmatpush.bf16.msra.mxu0 0
        %560 = vmatpush.bf16.msra.mxu0 %v548
        %561 = vmatpush.bf16.msra.mxu0 %v547
        %562 = vmatmul.bf16.gmra.mxu0 %v552
        %v563 = vpop.f32.mrf.mxu0
        %v564 = vadd.f32 %v536, %v563
        %v565 = vpop.f32.mrf.mxu0
        %566 = vdwg.mxu0
        %567 = vmax.xlane.f32.xlu0 %v564
        %v568 = vpop.xlane.xlu0 %567
        %v569 = vsub.f32 %v564, %v568
        %v570 = vmul.f32 %v569, 1.442695
        %v571 = vpow.pop %v570
        %572 = vadd.xlane.f32.xlu0 %v571
        %v573 = vpop.xlane.xlu0 %572
        %v574 = vrcp.pop %v573
        %v575 = vmul.f32 %v573, %v574
        %v576 = vsub.f32 1.0, %v575
        %v577 = vmul.f32 %v574, %v576
        %v578 = vadd.f32 %v574, %v577
        %vm579 = vweird.f32 %v573
        %vm580 = vweird.f32 %v574
        %vm581 = vmor %vm579, %vm580
        %v582 = vsel %vm581, %v574, %v578
        %v583 = vand.u32 2147483647, %v573
        %vm584 = vcmp.eq.f32.partialorder %v583, 8.507059e+37
        %v585 = vand.u32 %v573, 2147483648
        %v586 = vor.u32 1.1754944e-38, %v585
        %v587 = vsel %vm584, %v586, %v582
        %v588 = vmul.f32 %v571, %v587
        %v589 = vmul.f32 %v588, 1.442695
        %v590 = vpow.pop %v589
        %591 = vset.pattern.permute.xlu0 3
        %592 = vperm.xlu0 %591, %v267
        %v593 = vpop.permute.xlu0 %592
        %v595 = vmul.f32 %v593, %v590
        %v596 = vadd.f32 %v530, %v595
        %s597 = scalar_lea.vmem %s4, 64
        %v598 = vld [vmem:[%s597] sm:$0xf]
        %v599 = vld [vmem:[%s597 + $0x4] sm:$0xf]
        %v600 = vld [vmem:[%s597 + $0x8] sm:$0xf]
        %v601 = vld [vmem:[%s597 + $0xc] sm:$0xf]
        %v602 = vperm.slane %v331, 4
        %v603 = vunpack.c.h.b16 %v330
        %v604 = vpack.c.b16 %v603, %v603
        %v609 = vunpack.c.l.b16 %v598
        %v610 = vunpack.c.l.b16 %v599
        %v611 = vunpack.c.l.b16 %v600
        %v612 = vunpack.c.l.b16 %v601
        %v613 = vpack.c.b16 %v610, %v609
        %v614 = vpack.c.b16 %v612, %v611
        %v618 = vsel %vm298, %v604, 0
        %620 = vmatpush.bf16.msra.mxu0 0
        %621 = vmatpush.bf16.msra.mxu0 0
        %622 = vmatpush.bf16.msra.mxu0 0
        %623 = vmatpush.bf16.msra.mxu0 0
        %624 = vmatpush.bf16.msra.mxu0 0
        %625 = vmatpush.bf16.msra.mxu0 0
        %626 = vmatpush.bf16.msra.mxu0 %v614
        %627 = vmatpush.bf16.msra.mxu0 %v613
        %628 = vmatmul.bf16.gmra.mxu0 %v618
        %v629 = vpop.f32.mrf.mxu0
        %v630 = vadd.f32 %v602, %v629
        %v631 = vpop.f32.mrf.mxu0
        %632 = vdwg.mxu0
        %633 = vmax.xlane.f32.xlu0 %v630
        %v634 = vpop.xlane.xlu0 %633
        %v635 = vsub.f32 %v630, %v634
        %v636 = vmul.f32 %v635, 1.442695
        %v637 = vpow.pop %v636
        %638 = vadd.xlane.f32.xlu0 %v637
        %v639 = vpop.xlane.xlu0 %638
        %v640 = vrcp.pop %v639
        %v641 = vmul.f32 %v639, %v640
        %v642 = vsub.f32 1.0, %v641
        %v643 = vmul.f32 %v640, %v642
        %v644 = vadd.f32 %v640, %v643
        %vm645 = vweird.f32 %v639
        %vm646 = vweird.f32 %v640
        %vm647 = vmor %vm645, %vm646
        %v648 = vsel %vm647, %v640, %v644
        %v649 = vand.u32 2147483647, %v639
        %vm650 = vcmp.eq.f32.partialorder %v649, 8.507059e+37
        %v651 = vand.u32 %v639, 2147483648
        %v652 = vor.u32 1.1754944e-38, %v651
        %v653 = vsel %vm650, %v652, %v648
        %v654 = vmul.f32 %v637, %v653
        %v655 = vmul.f32 %v654, 1.442695
        %v656 = vpow.pop %v655
        %657 = vset.pattern.permute.xlu0 4
        %658 = vperm.xlu0 %657, %v267
        %v659 = vpop.permute.xlu0 %658
        %v661 = vmul.f32 %v659, %v656
        %v662 = vadd.f32 %v596, %v661
        %s663 = scalar_lea.vmem %s4, 80
        %v664 = vld [vmem:[%s663] sm:$0xf]
        %v665 = vld [vmem:[%s663 + $0x4] sm:$0xf]
        %v666 = vld [vmem:[%s663 + $0x8] sm:$0xf]
        %v667 = vld [vmem:[%s663 + $0xc] sm:$0xf]
        %v668 = vperm.slane %v331, 5
        %669 = vrot.lane.b32.xlu0 %v604, 96
        %v670 = vpop.permute.xlu0 %669
        %v675 = vunpack.c.l.b16 %v664
        %v676 = vunpack.c.l.b16 %v665
        %v677 = vunpack.c.l.b16 %v666
        %v678 = vunpack.c.l.b16 %v667
        %v679 = vpack.c.b16 %v676, %v675
        %v680 = vpack.c.b16 %v678, %v677
        %v684 = vsel %vm298, %v670, 0
        %686 = vmatpush.bf16.msra.mxu0 0
        %687 = vmatpush.bf16.msra.mxu0 0
        %688 = vmatpush.bf16.msra.mxu0 0
        %689 = vmatpush.bf16.msra.mxu0 0
        %690 = vmatpush.bf16.msra.mxu0 0
        %691 = vmatpush.bf16.msra.mxu0 0
        %692 = vmatpush.bf16.msra.mxu0 %v680
        %693 = vmatpush.bf16.msra.mxu0 %v679
        %694 = vmatmul.bf16.gmra.mxu0 %v684
        %v695 = vpop.f32.mrf.mxu0
        %v696 = vadd.f32 %v668, %v695
        %v697 = vpop.f32.mrf.mxu0
        %698 = vdwg.mxu0
        %699 = vmax.xlane.f32.xlu0 %v696
        %v700 = vpop.xlane.xlu0 %699
        %v701 = vsub.f32 %v696, %v700
        %v702 = vmul.f32 %v701, 1.442695
        %v703 = vpow.pop %v702
        %704 = vadd.xlane.f32.xlu0 %v703
        %v705 = vpop.xlane.xlu0 %704
        %v706 = vrcp.pop %v705
        %v707 = vmul.f32 %v705, %v706
        %v708 = vsub.f32 1.0, %v707
        %v709 = vmul.f32 %v706, %v708
        %v710 = vadd.f32 %v706, %v709
        %vm711 = vweird.f32 %v705
        %vm712 = vweird.f32 %v706
        %vm713 = vmor %vm711, %vm712
        %v714 = vsel %vm713, %v706, %v710
        %v715 = vand.u32 2147483647, %v705
        %vm716 = vcmp.eq.f32.partialorder %v715, 8.507059e+37
        %v717 = vand.u32 %v705, 2147483648
        %v718 = vor.u32 1.1754944e-38, %v717
        %v719 = vsel %vm716, %v718, %v714
        %v720 = vmul.f32 %v703, %v719
        %v721 = vmul.f32 %v720, 1.442695
        %v722 = vpow.pop %v721
        %723 = vset.pattern.permute.xlu0 5
        %724 = vperm.xlu0 %723, %v267
        %v725 = vpop.permute.xlu0 %724
        %v727 = vmul.f32 %v725, %v722
        %v728 = vadd.f32 %v662, %v727
        %s729 = scalar_lea.vmem %s4, 96
        %v730 = vld [vmem:[%s729] sm:$0xf]
        %v731 = vld [vmem:[%s729 + $0x4] sm:$0xf]
        %v732 = vld [vmem:[%s729 + $0x8] sm:$0xf]
        %v733 = vld [vmem:[%s729 + $0xc] sm:$0xf]
        %v734 = vperm.slane %v331, 6
        %735 = vrot.lane.b32.xlu0 %v604, 64
        %v736 = vpop.permute.xlu0 %735
        %v741 = vunpack.c.l.b16 %v730
        %v742 = vunpack.c.l.b16 %v731
        %v743 = vunpack.c.l.b16 %v732
        %v744 = vunpack.c.l.b16 %v733
        %v745 = vpack.c.b16 %v742, %v741
        %v746 = vpack.c.b16 %v744, %v743
        %v750 = vsel %vm298, %v736, 0
        %752 = vmatpush.bf16.msra.mxu0 0
        %753 = vmatpush.bf16.msra.mxu0 0
        %754 = vmatpush.bf16.msra.mxu0 0
        %755 = vmatpush.bf16.msra.mxu0 0
        %756 = vmatpush.bf16.msra.mxu0 0
        %757 = vmatpush.bf16.msra.mxu0 0
        %758 = vmatpush.bf16.msra.mxu0 %v746
        %759 = vmatpush.bf16.msra.mxu0 %v745
        %760 = vmatmul.bf16.gmra.mxu0 %v750
        %v761 = vpop.f32.mrf.mxu0
        %v762 = vadd.f32 %v734, %v761
        %v763 = vpop.f32.mrf.mxu0
        %764 = vdwg.mxu0
        %765 = vmax.xlane.f32.xlu0 %v762
        %v766 = vpop.xlane.xlu0 %765
        %v767 = vsub.f32 %v762, %v766
        %v768 = vmul.f32 %v767, 1.442695
        %v769 = vpow.pop %v768
        %770 = vadd.xlane.f32.xlu0 %v769
        %v771 = vpop.xlane.xlu0 %770
        %v772 = vrcp.pop %v771
        %v773 = vmul.f32 %v771, %v772
        %v774 = vsub.f32 1.0, %v773
        %v775 = vmul.f32 %v772, %v774
        %v776 = vadd.f32 %v772, %v775
        %vm777 = vweird.f32 %v771
        %vm778 = vweird.f32 %v772
        %vm779 = vmor %vm777, %vm778
        %v780 = vsel %vm779, %v772, %v776
        %v781 = vand.u32 2147483647, %v771
        %vm782 = vcmp.eq.f32.partialorder %v781, 8.507059e+37
        %v783 = vand.u32 %v771, 2147483648
        %v784 = vor.u32 1.1754944e-38, %v783
        %v785 = vsel %vm782, %v784, %v780
        %v786 = vmul.f32 %v769, %v785
        %v787 = vmul.f32 %v786, 1.442695
        %v788 = vpow.pop %v787
        %789 = vset.pattern.permute.xlu0 6
        %790 = vperm.xlu0 %789, %v267
        %v791 = vpop.permute.xlu0 %790
        %v793 = vmul.f32 %v791, %v788
        %v794 = vadd.f32 %v728, %v793
        %s795 = scalar_lea.vmem %s4, 112
        %v796 = vld [vmem:[%s795] sm:$0xf]
        %v797 = vld [vmem:[%s795 + $0x4] sm:$0xf]
        %v798 = vld [vmem:[%s795 + $0x8] sm:$0xf]
        %v799 = vld [vmem:[%s795 + $0xc] sm:$0xf]
        %v800 = vperm.slane %v331, 7
        %801 = vrot.lane.b32.xlu0 %v604, 32
        %v802 = vpop.permute.xlu0 %801
        %v807 = vunpack.c.l.b16 %v796
        %v808 = vunpack.c.l.b16 %v797
        %v809 = vunpack.c.l.b16 %v798
        %v810 = vunpack.c.l.b16 %v799
        %v811 = vpack.c.b16 %v808, %v807
        %v812 = vpack.c.b16 %v810, %v809
        %v816 = vsel %vm298, %v802, 0
        %818 = vmatpush.bf16.msra.mxu0 0
        %819 = vmatpush.bf16.msra.mxu0 0
        %820 = vmatpush.bf16.msra.mxu0 0
        %821 = vmatpush.bf16.msra.mxu0 0
        %822 = vmatpush.bf16.msra.mxu0 0
        %823 = vmatpush.bf16.msra.mxu0 0
        %824 = vmatpush.bf16.msra.mxu0 %v812
        %825 = vmatpush.bf16.msra.mxu0 %v811
        %826 = vmatmul.bf16.gmra.mxu0 %v816
        %v827 = vpop.f32.mrf.mxu0
        %v828 = vadd.f32 %v800, %v827
        %v829 = vpop.f32.mrf.mxu0
        %830 = vdwg.mxu0
        %831 = vmax.xlane.f32.xlu0 %v828
        %v832 = vpop.xlane.xlu0 %831
        %v833 = vsub.f32 %v828, %v832
        %v834 = vmul.f32 %v833, 1.442695
        %v835 = vpow.pop %v834
        %836 = vadd.xlane.f32.xlu0 %v835
        %v837 = vpop.xlane.xlu0 %836
        %v838 = vrcp.pop %v837
        %v839 = vmul.f32 %v837, %v838
        %v840 = vsub.f32 1.0, %v839
        %v841 = vmul.f32 %v838, %v840
        %v842 = vadd.f32 %v838, %v841
        %vm843 = vweird.f32 %v837
        %vm844 = vweird.f32 %v838
        %vm845 = vmor %vm843, %vm844
        %v846 = vsel %vm845, %v838, %v842
        %v847 = vand.u32 2147483647, %v837
        %vm848 = vcmp.eq.f32.partialorder %v847, 8.507059e+37
        %v849 = vand.u32 %v837, 2147483648
        %v850 = vor.u32 1.1754944e-38, %v849
        %v851 = vsel %vm848, %v850, %v846
        %v852 = vmul.f32 %v835, %v851
        %v853 = vmul.f32 %v852, 1.442695
        %v854 = vpow.pop %v853
        %855 = vset.pattern.permute.xlu0 7
        %856 = vperm.xlu0 %855, %v267
        %v857 = vpop.permute.xlu0 %856
        %v859 = vmul.f32 %v857, %v854
        %v860 = vadd.f32 %v794, %v859
        %vm861 = vcmp.eq.f32.partialorder %v860, 0.0
        %v862 = vsel %vm861, 2.220446e-16, %v860
        %v863 = vlog2.pop %v862
        %v864 = vmul.f32 %v863, 0.6931472
        %865 = vst [vmem:[%s255] sm:$0xff] %v864
        %s866 = sand.u32 %s164, 1
        %s867 = scalar_lea.sflag [#allocation3], %s866
        %s868 = sand.u32 %s164, 1
        %s869 = smul.addr %s868, 8
        %s870 = scalar_lea.vmem [#allocation2], %s869
        // Predicated region
        $region45: #{moe_forward.3} parent=43 // pred_check
          %p871 = pneg %p174
        $region46: #{moe_forward.3} parent=43 // pred_check_branch
          %873 = sbr.rel (%p871) target = $region48
        $region47: #{moe_forward.3} parent=43 // pred_region
          %875 = vsyncadd %s867, 0
          %s876 = smul.addr %s20, 8
          %s877 = scalar_lea.hbm %s6, %s876
          %s879 = sshll.u32 %s870, 4
          %s880 = int_to_ptr.vmem [resolvable:$true] %s879
          %s881 = sshll.u32 %s877, 4
          %s882 = int_to_ptr.hbm [resolvable:$true] %s881
          %884 = dma.vmem_to_hbm [thread:$0]  %s880, 128, %s882, %s867
        $region48: #{moe_forward.3} parent=43 // pred_fallthru
          _
      $region44: #{moe_forward.3} parent=5 // pred_fallthru
        _
      %p885 = scmp.le.s32.totalorder 2, %s15
      // Predicated region
      $region49: #{moe_forward.3} parent=5 // pred_check
        %p886 = pneg %p885
      $region50: #{moe_forward.3} parent=5 // pred_check_branch
        %888 = sbr.rel (%p886) target = $region52
      $region51: #{moe_forward.3} parent=5 // pred_region
        %s889 = ssub.s32 %s15, 2
        // Predicated region
        $region53: #{moe_forward.3} parent=51 // pred_check
          %p890 = pneg %p180
        $region54: #{moe_forward.3} parent=51 // pred_check_branch
          %892 = sbr.rel (%p890) target = $region56
        $region55: #{moe_forward.3} parent=51 // pred_region
          %s893 = sand.u32 %s165, 1
          %s894 = scalar_lea.sflag [#allocation3], %s893
          %s895 = sand.u32 %s165, 1
          %s896 = smul.addr %s895, 8
          %s897 = scalar_lea.vmem [#allocation2], %s896
          %899 = dma.done %s894, 128
        $region56: #{moe_forward.3} parent=51 // pred_fallthru
          _
      $region52: #{moe_forward.3} parent=5 // pred_fallthru
        _
    $region6: #{moe_forward.3} parent=1 // loop_footer
      %s19 = sadd.s32 1, %s15
    $region7: #{moe_forward.3} parent=1 // loop_footer_branch
      %14 = sbr.rel target = $region3
    $region8: #{moe_forward.3} parent=1 // loop_exit
      _
    %900 = vsyncpa [#allocation3], 1
    %s901 = scalar_lea.sflag [#allocation3], 1
    %902 = vsyncpa %s901, 1

</llo_original>
